<compile_context>
chip_gen: v7x
topology: tpu7x:2x2x1
jax: 0.10.0
libtpu: 0.0.40
codegen_flags: <defaults>
</compile_context>

<pallas_src>
import functools

import jax
import jax.numpy as jnp
from jax import lax
from jax.experimental import pallas as pl
from jax.experimental.pallas import tpu as pltpu


def _aspp_kernel(x_ref, w_ref, b_ref, o_ref, slab_ref, *, TH, W, mr, rates, Cin):
    """One (batch, H-tile, Cout-tile) output block of the summed dilated convs.

    x_ref:    (1, Hp, Wp, Cin)      bf16   padded image for this batch
    w_ref:    (R*9*Cin, TC)         bf16   flat lane-dense weight slab
    b_ref:    (1, TC)               f32    summed (lane-padded) biases
    o_ref:    (1, TH, W, TC)               output tile
    slab_ref: (TH*W, R*9*Cin)       bf16   im2col scratch
    """
    TC = o_ref.shape[-1]
    halo = TH + 2 * mr

    # One dynamic (sublane-aligned) load of the haloed row band; every tap
    # window below is a static slice of this value.
    h0 = pl.multiple_of(pl.program_id(1) * TH, TH)
    tile = x_ref[:, pl.ds(h0, halo), :, :]            # (1, halo, Wp, Cin)

    # Build the im2col slab: tap t = r*9 + kh*3 + kw occupies columns
    # [t*Cin, (t+1)*Cin), matching the wrapper's weight flattening order.
    tap = 0
    for rate in rates:
        for kh in range(3):
            r0 = mr + (kh - 1) * rate                 # static row offset in tile
            for kw in range(3):
                c0 = mr + (kw - 1) * rate             # static col offset
                win = tile[:, r0:r0 + TH, c0:c0 + W, :]          # (1, TH, W, Cin)
                slab_ref[:, tap * Cin:(tap + 1) * Cin] = win.reshape(TH * W, Cin)
                tap += 1

    # Single fused large-K bf16 matmul on the MXU, f32 accumulation.
    out = jnp.dot(slab_ref[...], w_ref[...], preferred_element_type=jnp.float32)
    out = out + b_ref[...]                                        # (1, TC) broadcast
    o_ref[...] = out.reshape(1, TH, W, TC).astype(o_ref.dtype)


def aspp_forward(x_nchw, weights_oihw, biases, rates):
    """x_nchw: (B, Cin, H, W); weights_oihw: (R, Cout, Cin, 3, 3); biases: (R, Cout)."""
    B, Cin, H, W = x_nchw.shape
    R, Cout = weights_oihw.shape[0], weights_oihw.shape[1]
    rates = tuple(int(r) for r in rates)
    mr = max(rates)
    Hp, Wp = H + 2 * mr, W + 2 * mr

    TH = 8 if H % 8 == 0 else H                       # spatial H tile
    TC = 128                                          # lane-dense Cout tile
    Cout_p = ((Cout + TC - 1) // TC) * TC
    n_h, n_c = H // TH, Cout_p // TC
    KTOT = R * 9 * Cin

    # Layout glue: NCHW -> NHWC, zero padding reproduces conv padding=rate
    # semantics (offsets mr + (k-1)*rate), bf16 for the MXU.
    x_nhwc = jnp.transpose(x_nchw, (0, 2, 3, 1))
    x_pad = jnp.pad(x_nhwc, ((0, 0), (mr, mr), (mr, mr), (0, 0))).astype(jnp.bfloat16)

    # (R, Cout, Cin, 3, 3) -> (R, 3, 3, Cin, Cout) -> (R*9*Cin, Cout) -> pad lanes.
    w_flat = jnp.transpose(weights_oihw, (0, 3, 4, 2, 1)).reshape(KTOT, Cout)
    w_flat = jnp.pad(w_flat, ((0, 0), (0, Cout_p - Cout))).astype(jnp.bfloat16)

    b_sum = jnp.sum(biases, axis=0, keepdims=True)                # (1, Cout)
    b_sum = jnp.pad(b_sum, ((0, 0), (0, Cout_p - Cout))).astype(jnp.float32)

    kernel = functools.partial(
        _aspp_kernel, TH=TH, W=W, mr=mr, rates=rates, Cin=Cin)

    out_nhwc = pl.pallas_call(
        kernel,
        out_shape=jax.ShapeDtypeStruct((B, H, W, Cout_p), x_nchw.dtype),
        grid_spec=pltpu.PrefetchScalarGridSpec(
            num_scalar_prefetch=0,
            grid=(B, n_h, n_c),
            in_specs=[
                pl.BlockSpec((1, Hp, Wp, Cin), lambda b, h, c: (b, 0, 0, 0)),
                pl.BlockSpec((KTOT, TC), lambda b, h, c: (0, c)),
                pl.BlockSpec((1, TC), lambda b, h, c: (0, c)),
            ],
            out_specs=pl.BlockSpec((1, TH, W, TC), lambda b, h, c: (b, h, 0, c)),
            scratch_shapes=[pltpu.VMEM((TH * W, KTOT), jnp.bfloat16)],
        ),
        compiler_params=pltpu.CompilerParams(
            dimension_semantics=("parallel", "parallel", "parallel"),
            vmem_limit_bytes=32 * 1024 * 1024),
    )(x_pad, w_flat, b_sum)

    out_nhwc = out_nhwc[..., :Cout]                   # drop lane padding
    return jnp.transpose(out_nhwc, (0, 3, 1, 2))      # back to NCHW


def aspp_reference(x_nchw, weights_oihw, biases, rates):
    """Pure-JAX (f32) reference matching the PyTorch forward."""
    out = None
    for i, rate in enumerate(rates):
        y = lax.conv_general_dilated(
            x_nchw, weights_oihw[i], window_strides=(1, 1),
            padding=[(rate, rate), (rate, rate)],
            rhs_dilation=(rate, rate),
            dimension_numbers=("NCHW", "OIHW", "NCHW"))
        y = y + biases[i][None, :, None, None]
        out = y if out is None else out + y
    return out


if __name__ == "__main__":
    B, Cin, Cout, H, W = 2, 4, 4, 16, 16
    rates = (1, 2, 4)
    R = len(rates)

    key = jax.random.PRNGKey(0)
    kx, kw, kb = jax.random.split(key, 3)

    # Input (NCHW, as the PyTorch module would receive).
    x = jax.random.normal(kx, (B, Cin, H, W), dtype=jnp.float32)

    # Parameters: weight ~ N(0, 0.01) as in the module init; small non-zero
    # biases so the bias path is actually exercised.
    weights = 0.01 * jax.random.normal(kw, (R, Cout, Cin, 3, 3), dtype=jnp.float32)
    biases = 0.1 * jax.random.normal(kb, (R, Cout), dtype=jnp.float32)

    out = aspp_forward(x, weights, biases, rates)
    out = jax.block_until_ready(out)

    ref = aspp_reference(x, weights, biases, rates)
    assert out.shape == (B, Cout, H, W), out.shape
    # bf16 MXU inputs -> looser tolerance than pure f32.
    assert jnp.allclose(out, ref, rtol=2e-2, atol=5e-3), \
        float(jnp.max(jnp.abs(out - ref)))

    print("KERNEL_OK")
</pallas_src>

<mosaic_0001>
module attributes {stable_mosaic.version = 11 : i64} {
  func.func @_aspp_kernel(%arg0: i32, %arg1: i32, %arg2: i32, %arg3: memref<1x24x24x4xbf16, #tpu.memory_space<vmem>>, %arg4: memref<108x128xbf16, #tpu.memory_space<vmem>>, %arg5: memref<1x128xf32, #tpu.memory_space<vmem>>, %arg6: memref<1x8x16x128xf32, #tpu.memory_space<vmem>>, %arg7: memref<128x108xbf16, #tpu.memory_space<vmem>>) attributes {dimension_semantics = [#tpu.dimension_semantics<parallel>, #tpu.dimension_semantics<parallel>, #tpu.dimension_semantics<parallel>], iteration_bounds = array<i64: 2, 2, 1>, scalar_prefetch = 0 : i64, scratch_operands = 1 : i64, tpu.core_type = #tpu.core_type<tc>, window_params = [{transform_indices = @transform_0, window_bounds = array<i64: 1, 24, 24, 4>}, {transform_indices = @transform_1, window_bounds = array<i64: 108, 128>}, {transform_indices = @transform_2, window_bounds = array<i64: 1, 128>}, {transform_indices = @transform_3, window_bounds = array<i64: 1, 8, 16, 128>}]} {
    %c8_i32 = arith.constant 8 : i32
    %0 = arith.muli %arg1, %c8_i32 : i32
    %1 = tpu.assume_multiple %0, 8 : i32
    %c0 = arith.constant 0 : index
    %2 = arith.index_cast %1 : i32 to index
    %c0_0 = arith.constant 0 : index
    %c0_1 = arith.constant 0 : index
    %3 = vector.load %arg3[%c0, %2, %c0_0, %c0_1] : memref<1x24x24x4xbf16, #tpu.memory_space<vmem>>, vector<1x16x24x4xbf16>
    %4 = vector.extract_strided_slice %3 {offsets = [0, 3, 3, 0], sizes = [1, 8, 16, 4], strides = [1, 1, 1, 1]} : vector<1x16x24x4xbf16> to vector<1x8x16x4xbf16>
    %5 = vector.shape_cast %4 : vector<1x8x16x4xbf16> to vector<128x4xbf16>
    %c0_2 = arith.constant 0 : index
    %c0_3 = arith.constant 0 : index
    %6 = vector.load %arg7[%c0_2, %c0_3] : memref<128x108xbf16, #tpu.memory_space<vmem>>, vector<128x4xbf16>
    tpu.vector_store %arg7[%c0_2, %c0_3], %5 {strides = array<i32>} : memref<128x108xbf16, #tpu.memory_space<vmem>>, vector<128x4xbf16>,
    %7 = vector.extract_strided_slice %3 {offsets = [0, 3, 4, 0], sizes = [1, 8, 16, 4], strides = [1, 1, 1, 1]} : vector<1x16x24x4xbf16> to vector<1x8x16x4xbf16>
    %8 = vector.shape_cast %7 : vector<1x8x16x4xbf16> to vector<128x4xbf16>
    %c0_4 = arith.constant 0 : index
    %c4 = arith.constant 4 : index
    %9 = vector.load %arg7[%c0_4, %c4] : memref<128x108xbf16, #tpu.memory_space<vmem>>, vector<128x4xbf16>
    tpu.vector_store %arg7[%c0_4, %c4], %8 {strides = array<i32>} : memref<128x108xbf16, #tpu.memory_space<vmem>>, vector<128x4xbf16>,
    %10 = vector.extract_strided_slice %3 {offsets = [0, 3, 5, 0], sizes = [1, 8, 16, 4], strides = [1, 1, 1, 1]} : vector<1x16x24x4xbf16> to vector<1x8x16x4xbf16>
    %11 = vector.shape_cast %10 : vector<1x8x16x4xbf16> to vector<128x4xbf16>
    %c0_5 = arith.constant 0 : index
    %c8 = arith.constant 8 : index
    %12 = vector.load %arg7[%c0_5, %c8] : memref<128x108xbf16, #tpu.memory_space<vmem>>, vector<128x4xbf16>
    tpu.vector_store %arg7[%c0_5, %c8], %11 {strides = array<i32>} : memref<128x108xbf16, #tpu.memory_space<vmem>>, vector<128x4xbf16>,
    %13 = vector.extract_strided_slice %3 {offsets = [0, 4, 3, 0], sizes = [1, 8, 16, 4], strides = [1, 1, 1, 1]} : vector<1x16x24x4xbf16> to vector<1x8x16x4xbf16>
    %14 = vector.shape_cast %13 : vector<1x8x16x4xbf16> to vector<128x4xbf16>
    %c0_6 = arith.constant 0 : index
    %c12 = arith.constant 12 : index
    %15 = vector.load %arg7[%c0_6, %c12] : memref<128x108xbf16, #tpu.memory_space<vmem>>, vector<128x4xbf16>
    tpu.vector_store %arg7[%c0_6, %c12], %14 {strides = array<i32>} : memref<128x108xbf16, #tpu.memory_space<vmem>>, vector<128x4xbf16>,
    %16 = vector.extract_strided_slice %3 {offsets = [0, 4, 4, 0], sizes = [1, 8, 16, 4], strides = [1, 1, 1, 1]} : vector<1x16x24x4xbf16> to vector<1x8x16x4xbf16>
    %17 = vector.shape_cast %16 : vector<1x8x16x4xbf16> to vector<128x4xbf16>
    %c0_7 = arith.constant 0 : index
    %c16 = arith.constant 16 : index
    %18 = vector.load %arg7[%c0_7, %c16] : memref<128x108xbf16, #tpu.memory_space<vmem>>, vector<128x4xbf16>
    tpu.vector_store %arg7[%c0_7, %c16], %17 {strides = array<i32>} : memref<128x108xbf16, #tpu.memory_space<vmem>>, vector<128x4xbf16>,
    %19 = vector.extract_strided_slice %3 {offsets = [0, 4, 5, 0], sizes = [1, 8, 16, 4], strides = [1, 1, 1, 1]} : vector<1x16x24x4xbf16> to vector<1x8x16x4xbf16>
    %20 = vector.shape_cast %19 : vector<1x8x16x4xbf16> to vector<128x4xbf16>
    %c0_8 = arith.constant 0 : index
    %c20 = arith.constant 20 : index
    %21 = vector.load %arg7[%c0_8, %c20] : memref<128x108xbf16, #tpu.memory_space<vmem>>, vector<128x4xbf16>
    tpu.vector_store %arg7[%c0_8, %c20], %20 {strides = array<i32>} : memref<128x108xbf16, #tpu.memory_space<vmem>>, vector<128x4xbf16>,
    %22 = vector.extract_strided_slice %3 {offsets = [0, 5, 3, 0], sizes = [1, 8, 16, 4], strides = [1, 1, 1, 1]} : vector<1x16x24x4xbf16> to vector<1x8x16x4xbf16>
    %23 = vector.shape_cast %22 : vector<1x8x16x4xbf16> to vector<128x4xbf16>
    %c0_9 = arith.constant 0 : index
    %c24 = arith.constant 24 : index
    %24 = vector.load %arg7[%c0_9, %c24] : memref<128x108xbf16, #tpu.memory_space<vmem>>, vector<128x4xbf16>
    tpu.vector_store %arg7[%c0_9, %c24], %23 {strides = array<i32>} : memref<128x108xbf16, #tpu.memory_space<vmem>>, vector<128x4xbf16>,
    %25 = vector.extract_strided_slice %3 {offsets = [0, 5, 4, 0], sizes = [1, 8, 16, 4], strides = [1, 1, 1, 1]} : vector<1x16x24x4xbf16> to vector<1x8x16x4xbf16>
    %26 = vector.shape_cast %25 : vector<1x8x16x4xbf16> to vector<128x4xbf16>
    %c0_10 = arith.constant 0 : index
    %c28 = arith.constant 28 : index
    %27 = vector.load %arg7[%c0_10, %c28] : memref<128x108xbf16, #tpu.memory_space<vmem>>, vector<128x4xbf16>
    tpu.vector_store %arg7[%c0_10, %c28], %26 {strides = array<i32>} : memref<128x108xbf16, #tpu.memory_space<vmem>>, vector<128x4xbf16>,
    %28 = vector.extract_strided_slice %3 {offsets = [0, 5, 5, 0], sizes = [1, 8, 16, 4], strides = [1, 1, 1, 1]} : vector<1x16x24x4xbf16> to vector<1x8x16x4xbf16>
    %29 = vector.shape_cast %28 : vector<1x8x16x4xbf16> to vector<128x4xbf16>
    %c0_11 = arith.constant 0 : index
    %c32 = arith.constant 32 : index
    %30 = vector.load %arg7[%c0_11, %c32] : memref<128x108xbf16, #tpu.memory_space<vmem>>, vector<128x4xbf16>
    tpu.vector_store %arg7[%c0_11, %c32], %29 {strides = array<i32>} : memref<128x108xbf16, #tpu.memory_space<vmem>>, vector<128x4xbf16>,
    %31 = vector.extract_strided_slice %3 {offsets = [0, 2, 2, 0], sizes = [1, 8, 16, 4], strides = [1, 1, 1, 1]} : vector<1x16x24x4xbf16> to vector<1x8x16x4xbf16>
    %32 = vector.shape_cast %31 : vector<1x8x16x4xbf16> to vector<128x4xbf16>
    %c0_12 = arith.constant 0 : index
    %c36 = arith.constant 36 : index
    %33 = vector.load %arg7[%c0_12, %c36] : memref<128x108xbf16, #tpu.memory_space<vmem>>, vector<128x4xbf16>
    tpu.vector_store %arg7[%c0_12, %c36], %32 {strides = array<i32>} : memref<128x108xbf16, #tpu.memory_space<vmem>>, vector<128x4xbf16>,
    %34 = vector.extract_strided_slice %3 {offsets = [0, 2, 4, 0], sizes = [1, 8, 16, 4], strides = [1, 1, 1, 1]} : vector<1x16x24x4xbf16> to vector<1x8x16x4xbf16>
    %35 = vector.shape_cast %34 : vector<1x8x16x4xbf16> to vector<128x4xbf16>
    %c0_13 = arith.constant 0 : index
    %c40 = arith.constant 40 : index
    %36 = vector.load %arg7[%c0_13, %c40] : memref<128x108xbf16, #tpu.memory_space<vmem>>, vector<128x4xbf16>
    tpu.vector_store %arg7[%c0_13, %c40], %35 {strides = array<i32>} : memref<128x108xbf16, #tpu.memory_space<vmem>>, vector<128x4xbf16>,
    %37 = vector.extract_strided_slice %3 {offsets = [0, 2, 6, 0], sizes = [1, 8, 16, 4], strides = [1, 1, 1, 1]} : vector<1x16x24x4xbf16> to vector<1x8x16x4xbf16>
    %38 = vector.shape_cast %37 : vector<1x8x16x4xbf16> to vector<128x4xbf16>
    %c0_14 = arith.constant 0 : index
    %c44 = arith.constant 44 : index
    %39 = vector.load %arg7[%c0_14, %c44] : memref<128x108xbf16, #tpu.memory_space<vmem>>, vector<128x4xbf16>
    tpu.vector_store %arg7[%c0_14, %c44], %38 {strides = array<i32>} : memref<128x108xbf16, #tpu.memory_space<vmem>>, vector<128x4xbf16>,
    %40 = vector.extract_strided_slice %3 {offsets = [0, 4, 2, 0], sizes = [1, 8, 16, 4], strides = [1, 1, 1, 1]} : vector<1x16x24x4xbf16> to vector<1x8x16x4xbf16>
    %41 = vector.shape_cast %40 : vector<1x8x16x4xbf16> to vector<128x4xbf16>
    %c0_15 = arith.constant 0 : index
    %c48 = arith.constant 48 : index
    %42 = vector.load %arg7[%c0_15, %c48] : memref<128x108xbf16, #tpu.memory_space<vmem>>, vector<128x4xbf16>
    tpu.vector_store %arg7[%c0_15, %c48], %41 {strides = array<i32>} : memref<128x108xbf16, #tpu.memory_space<vmem>>, vector<128x4xbf16>,
    %43 = vector.extract_strided_slice %3 {offsets = [0, 4, 4, 0], sizes = [1, 8, 16, 4], strides = [1, 1, 1, 1]} : vector<1x16x24x4xbf16> to vector<1x8x16x4xbf16>
    %44 = vector.shape_cast %43 : vector<1x8x16x4xbf16> to vector<128x4xbf16>
    %c0_16 = arith.constant 0 : index
    %c52 = arith.constant 52 : index
    %45 = vector.load %arg7[%c0_16, %c52] : memref<128x108xbf16, #tpu.memory_space<vmem>>, vector<128x4xbf16>
    tpu.vector_store %arg7[%c0_16, %c52], %44 {strides = array<i32>} : memref<128x108xbf16, #tpu.memory_space<vmem>>, vector<128x4xbf16>,
    %46 = vector.extract_strided_slice %3 {offsets = [0, 4, 6, 0], sizes = [1, 8, 16, 4], strides = [1, 1, 1, 1]} : vector<1x16x24x4xbf16> to vector<1x8x16x4xbf16>
    %47 = vector.shape_cast %46 : vector<1x8x16x4xbf16> to vector<128x4xbf16>
    %c0_17 = arith.constant 0 : index
    %c56 = arith.constant 56 : index
    %48 = vector.load %arg7[%c0_17, %c56] : memref<128x108xbf16, #tpu.memory_space<vmem>>, vector<128x4xbf16>
    tpu.vector_store %arg7[%c0_17, %c56], %47 {strides = array<i32>} : memref<128x108xbf16, #tpu.memory_space<vmem>>, vector<128x4xbf16>,
    %49 = vector.extract_strided_slice %3 {offsets = [0, 6, 2, 0], sizes = [1, 8, 16, 4], strides = [1, 1, 1, 1]} : vector<1x16x24x4xbf16> to vector<1x8x16x4xbf16>
    %50 = vector.shape_cast %49 : vector<1x8x16x4xbf16> to vector<128x4xbf16>
    %c0_18 = arith.constant 0 : index
    %c60 = arith.constant 60 : index
    %51 = vector.load %arg7[%c0_18, %c60] : memref<128x108xbf16, #tpu.memory_space<vmem>>, vector<128x4xbf16>
    tpu.vector_store %arg7[%c0_18, %c60], %50 {strides = array<i32>} : memref<128x108xbf16, #tpu.memory_space<vmem>>, vector<128x4xbf16>,
    %52 = vector.extract_strided_slice %3 {offsets = [0, 6, 4, 0], sizes = [1, 8, 16, 4], strides = [1, 1, 1, 1]} : vector<1x16x24x4xbf16> to vector<1x8x16x4xbf16>
    %53 = vector.shape_cast %52 : vector<1x8x16x4xbf16> to vector<128x4xbf16>
    %c0_19 = arith.constant 0 : index
    %c64 = arith.constant 64 : index
    %54 = vector.load %arg7[%c0_19, %c64] : memref<128x108xbf16, #tpu.memory_space<vmem>>, vector<128x4xbf16>
    tpu.vector_store %arg7[%c0_19, %c64], %53 {strides = array<i32>} : memref<128x108xbf16, #tpu.memory_space<vmem>>, vector<128x4xbf16>,
    %55 = vector.extract_strided_slice %3 {offsets = [0, 6, 6, 0], sizes = [1, 8, 16, 4], strides = [1, 1, 1, 1]} : vector<1x16x24x4xbf16> to vector<1x8x16x4xbf16>
    %56 = vector.shape_cast %55 : vector<1x8x16x4xbf16> to vector<128x4xbf16>
    %c0_20 = arith.constant 0 : index
    %c68 = arith.constant 68 : index
    %57 = vector.load %arg7[%c0_20, %c68] : memref<128x108xbf16, #tpu.memory_space<vmem>>, vector<128x4xbf16>
    tpu.vector_store %arg7[%c0_20, %c68], %56 {strides = array<i32>} : memref<128x108xbf16, #tpu.memory_space<vmem>>, vector<128x4xbf16>,
    %58 = vector.extract_strided_slice %3 {offsets = [0, 0, 0, 0], sizes = [1, 8, 16, 4], strides = [1, 1, 1, 1]} : vector<1x16x24x4xbf16> to vector<1x8x16x4xbf16>
    %59 = vector.shape_cast %58 : vector<1x8x16x4xbf16> to vector<128x4xbf16>
    %c0_21 = arith.constant 0 : index
    %c72 = arith.constant 72 : index
    %60 = vector.load %arg7[%c0_21, %c72] : memref<128x108xbf16, #tpu.memory_space<vmem>>, vector<128x4xbf16>
    tpu.vector_store %arg7[%c0_21, %c72], %59 {strides = array<i32>} : memref<128x108xbf16, #tpu.memory_space<vmem>>, vector<128x4xbf16>,
    %61 = vector.extract_strided_slice %3 {offsets = [0, 0, 4, 0], sizes = [1, 8, 16, 4], strides = [1, 1, 1, 1]} : vector<1x16x24x4xbf16> to vector<1x8x16x4xbf16>
    %62 = vector.shape_cast %61 : vector<1x8x16x4xbf16> to vector<128x4xbf16>
    %c0_22 = arith.constant 0 : index
    %c76 = arith.constant 76 : index
    %63 = vector.load %arg7[%c0_22, %c76] : memref<128x108xbf16, #tpu.memory_space<vmem>>, vector<128x4xbf16>
    tpu.vector_store %arg7[%c0_22, %c76], %62 {strides = array<i32>} : memref<128x108xbf16, #tpu.memory_space<vmem>>, vector<128x4xbf16>,
    %64 = vector.extract_strided_slice %3 {offsets = [0, 0, 8, 0], sizes = [1, 8, 16, 4], strides = [1, 1, 1, 1]} : vector<1x16x24x4xbf16> to vector<1x8x16x4xbf16>
    %65 = vector.shape_cast %64 : vector<1x8x16x4xbf16> to vector<128x4xbf16>
    %c0_23 = arith.constant 0 : index
    %c80 = arith.constant 80 : index
    %66 = vector.load %arg7[%c0_23, %c80] : memref<128x108xbf16, #tpu.memory_space<vmem>>, vector<128x4xbf16>
    tpu.vector_store %arg7[%c0_23, %c80], %65 {strides = array<i32>} : memref<128x108xbf16, #tpu.memory_space<vmem>>, vector<128x4xbf16>,
    %67 = vector.extract_strided_slice %3 {offsets = [0, 4, 0, 0], sizes = [1, 8, 16, 4], strides = [1, 1, 1, 1]} : vector<1x16x24x4xbf16> to vector<1x8x16x4xbf16>
    %68 = vector.shape_cast %67 : vector<1x8x16x4xbf16> to vector<128x4xbf16>
    %c0_24 = arith.constant 0 : index
    %c84 = arith.constant 84 : index
    %69 = vector.load %arg7[%c0_24, %c84] : memref<128x108xbf16, #tpu.memory_space<vmem>>, vector<128x4xbf16>
    tpu.vector_store %arg7[%c0_24, %c84], %68 {strides = array<i32>} : memref<128x108xbf16, #tpu.memory_space<vmem>>, vector<128x4xbf16>,
    %70 = vector.extract_strided_slice %3 {offsets = [0, 4, 4, 0], sizes = [1, 8, 16, 4], strides = [1, 1, 1, 1]} : vector<1x16x24x4xbf16> to vector<1x8x16x4xbf16>
    %71 = vector.shape_cast %70 : vector<1x8x16x4xbf16> to vector<128x4xbf16>
    %c0_25 = arith.constant 0 : index
    %c88 = arith.constant 88 : index
    %72 = vector.load %arg7[%c0_25, %c88] : memref<128x108xbf16, #tpu.memory_space<vmem>>, vector<128x4xbf16>
    tpu.vector_store %arg7[%c0_25, %c88], %71 {strides = array<i32>} : memref<128x108xbf16, #tpu.memory_space<vmem>>, vector<128x4xbf16>,
    %73 = vector.extract_strided_slice %3 {offsets = [0, 4, 8, 0], sizes = [1, 8, 16, 4], strides = [1, 1, 1, 1]} : vector<1x16x24x4xbf16> to vector<1x8x16x4xbf16>
    %74 = vector.shape_cast %73 : vector<1x8x16x4xbf16> to vector<128x4xbf16>
    %c0_26 = arith.constant 0 : index
    %c92 = arith.constant 92 : index
    %75 = vector.load %arg7[%c0_26, %c92] : memref<128x108xbf16, #tpu.memory_space<vmem>>, vector<128x4xbf16>
    tpu.vector_store %arg7[%c0_26, %c92], %74 {strides = array<i32>} : memref<128x108xbf16, #tpu.memory_space<vmem>>, vector<128x4xbf16>,
    %76 = vector.extract_strided_slice %3 {offsets = [0, 8, 0, 0], sizes = [1, 8, 16, 4], strides = [1, 1, 1, 1]} : vector<1x16x24x4xbf16> to vector<1x8x16x4xbf16>
    %77 = vector.shape_cast %76 : vector<1x8x16x4xbf16> to vector<128x4xbf16>
    %c0_27 = arith.constant 0 : index
    %c96 = arith.constant 96 : index
    %78 = vector.load %arg7[%c0_27, %c96] : memref<128x108xbf16, #tpu.memory_space<vmem>>, vector<128x4xbf16>
    tpu.vector_store %arg7[%c0_27, %c96], %77 {strides = array<i32>} : memref<128x108xbf16, #tpu.memory_space<vmem>>, vector<128x4xbf16>,
    %79 = vector.extract_strided_slice %3 {offsets = [0, 8, 4, 0], sizes = [1, 8, 16, 4], strides = [1, 1, 1, 1]} : vector<1x16x24x4xbf16> to vector<1x8x16x4xbf16>
    %80 = vector.shape_cast %79 : vector<1x8x16x4xbf16> to vector<128x4xbf16>
    %c0_28 = arith.constant 0 : index
    %c100 = arith.constant 100 : index
    %81 = vector.load %arg7[%c0_28, %c100] : memref<128x108xbf16, #tpu.memory_space<vmem>>, vector<128x4xbf16>
    tpu.vector_store %arg7[%c0_28, %c100], %80 {strides = array<i32>} : memref<128x108xbf16, #tpu.memory_space<vmem>>, vector<128x4xbf16>,
    %82 = vector.extract_strided_slice %3 {offsets = [0, 8, 8, 0], sizes = [1, 8, 16, 4], strides = [1, 1, 1, 1]} : vector<1x16x24x4xbf16> to vector<1x8x16x4xbf16>
    %83 = vector.shape_cast %82 : vector<1x8x16x4xbf16> to vector<128x4xbf16>
    %c0_29 = arith.constant 0 : index
    %c104 = arith.constant 104 : index
    %84 = vector.load %arg7[%c0_29, %c104] : memref<128x108xbf16, #tpu.memory_space<vmem>>, vector<128x4xbf16>
    tpu.vector_store %arg7[%c0_29, %c104], %83 {strides = array<i32>} : memref<128x108xbf16, #tpu.memory_space<vmem>>, vector<128x4xbf16>,
    %c0_30 = arith.constant 0 : index
    %c0_31 = arith.constant 0 : index
    %85 = vector.load %arg7[%c0_30, %c0_31] : memref<128x108xbf16, #tpu.memory_space<vmem>>, vector<128x108xbf16>
    %c0_32 = arith.constant 0 : index
    %c0_33 = arith.constant 0 : index
    %86 = vector.load %arg4[%c0_32, %c0_33] : memref<108x128xbf16, #tpu.memory_space<vmem>>, vector<108x128xbf16>
    %cst = arith.constant dense<0.000000e+00> : vector<128x128xf32>
    %87 = tpu.matmul %85, %86, %cst {dimension_numbers = #tpu.dot_dimension_numbers<[1], [0], [0], [1], [0, 0, 1, 1], [], []>} : vector<128x108xbf16>, vector<108x128xbf16>, vector<128x128xf32> -> vector<128x128xf32>
    %c0_34 = arith.constant 0 : index
    %c0_35 = arith.constant 0 : index
    %88 = vector.load %arg5[%c0_34, %c0_35] : memref<1x128xf32, #tpu.memory_space<vmem>>, vector<1x128xf32>
    %89 = vector.broadcast %88 : vector<1x128xf32> to vector<128x128xf32>
    %90 = arith.addf %87, %89 : vector<128x128xf32>
    %91 = vector.shape_cast %90 : vector<128x128xf32> to vector<1x8x16x128xf32>
    %c0_36 = arith.constant 0 : index
    %c0_37 = arith.constant 0 : index
    %c0_38 = arith.constant 0 : index
    %c0_39 = arith.constant 0 : index
    %92 = vector.load %arg6[%c0_36, %c0_37, %c0_38, %c0_39] : memref<1x8x16x128xf32, #tpu.memory_space<vmem>>, vector<1x8x16x128xf32>
    tpu.vector_store %arg6[%c0_36, %c0_37, %c0_38, %c0_39], %91 {strides = array<i32>} : memref<1x8x16x128xf32, #tpu.memory_space<vmem>>, vector<1x8x16x128xf32>,
    return
  }
  func.func @transform_0(%arg0: i32, %arg1: i32, %arg2: i32) -> (i32, i32, i32, i32) {
    %c0_i32 = arith.constant 0 : i32
    %c0_i32_0 = arith.constant 0 : i32
    %c0_i32_1 = arith.constant 0 : i32
    %c0_i32_2 = arith.constant 0 : i32
    return %arg0, %c0_i32, %c0_i32_0, %c0_i32_1 : i32, i32, i32, i32
  }
  func.func @transform_1(%arg0: i32, %arg1: i32, %arg2: i32) -> (i32, i32) {
    %c0_i32 = arith.constant 0 : i32
    %c0_i32_0 = arith.constant 0 : i32
    return %c0_i32, %arg2 : i32, i32
  }
  func.func @transform_2(%arg0: i32, %arg1: i32, %arg2: i32) -> (i32, i32) {
    %c0_i32 = arith.constant 0 : i32
    %c0_i32_0 = arith.constant 0 : i32
    return %c0_i32, %arg2 : i32, i32
  }
  func.func @transform_3(%arg0: i32, %arg1: i32, %arg2: i32) -> (i32, i32, i32, i32) {
    %c0_i32 = arith.constant 0 : i32
    %c0_i32_0 = arith.constant 0 : i32
    return %arg0, %arg1, %c0_i32, %arg2 : i32, i32, i32, i32
  }
}

</mosaic_0001>

<llo_original>
// kernel: tpu_custom_call.1
$region0: #{tpu_custom_call.1}
  #allocation0 [shape = 'u32[]', space=smem, size = 0x4, offset = 0x4, fixed_abs, tag = 'smem constant byte address 0x4 - core index']
  #allocation1 [shape = 'u32[144,128]{1,0:T(1,128)}', space=vmem, size = 0x12000, scoped, tag = 'internal scratch']
  #allocation2 [shape = 'bf16[128,108]{1,0:T(16,128)(2,1)}', space=vmem, size = 0x8000, scoped, tag = 'scratch operand']
  %s0 = inlined_call_operand.vmem [shape: bf16[2,24,24,4], index: 0, kind: input, shape index: {}]
  %s1 = inlined_call_operand.vmem [shape: bf16[108,128], index: 1, kind: input, shape index: {}]
  %s2 = inlined_call_operand.vmem [shape: f32[1,128], index: 2, kind: input, shape index: {}]
  %s3 = inlined_call_operand.hbm [shape: f32[2,16,16,128], index: 3, kind: output, shape index: {}]
  %s4 = sld [smem:[#allocation0]]
  $region45: #{tpu_custom_call.1} parent=0
    _
  %s6 = ssub.s32 1, %s4
  %s7 = scalar_select 0, %s6, %s4
  $region1: #{tpu_custom_call.1} parent=0
    #allocation3 [shape = 'u8[131072]{0}', space=vmem, size = 0x20000, scoped, tag = 'output window, operand 0']
    #allocation4 [shape = 's32[2]{0}', space=sflag, size = 0x8, scoped, tag = 'scoped memory for tpu_custom_call.1']
    %8 = vsyncpa [#allocation4], 0
    %s9 = scalar_lea.sflag [#allocation4], 1
    %10 = vsyncpa %s9, 0
    loop: start=0, step=1, limit=6
    $region2: #{tpu_custom_call.1} parent=1 // loop_pre_header
      _
    $region3: #{tpu_custom_call.1} parent=1 // loop_header
      %s12 = sphi 0, %s16
      %p13 = scmp.ge.s32.totalorder %s12, 6
      %s19 = sphi 0, %s38
      %s20 = sphi 0, %s34
      %s21 = sphi 0, %s30
      %s22 = sphi 0, %s19
      %s23 = sphi 0, %s20
      %s24 = sphi 0, %s21
      %s25 = sphi 0, %s22
      %s26 = sphi 0, %s23
      %s27 = sphi 0, %s24
      %s41 = sphi 0, %s43
      %s44 = sphi 0, %s41
      %s45 = sphi 0, %s44
      %s61 = sphi 0, %s45
      %s67 = sphi 0, %s69
      %s70 = sphi 0, %s67
      %s71 = sphi 0, %s70
      %s87 = sphi 0, %s71
      %s93 = sphi 0, %s95
      %s96 = sphi 0, %s93
      %s97 = sphi 0, %s96
      %s113 = sphi 0, %s97
      %s123 = sphi 0, %s125
      %s126 = sphi 0, %s123
      %s127 = sphi 0, %s126
      %s143 = sphi 0, %s127
    $region4: #{tpu_custom_call.1} parent=1 // loop_header_branch
      %15 = sbr.rel (%p13) target = $region8
    $region5: #{tpu_custom_call.1} parent=1 // loop_body
      %s17 = ssub.s32 %s12, 1
      %s18 = ssub.s32 %s12, 2
      %s28 = sadd.s32 1, %s21
      %p29 = scmp.ge.s32.totalorder %s28, 1
      %s30 = scalar_select %p29, 0, %s28
      %s31 = sadd.s32 1, %s20
      %s32 = scalar_select %p29, %s31, %s20
      %p33 = scmp.ge.s32.totalorder %s32, 2
      %s34 = scalar_select %p33, 0, %s32
      %s35 = sadd.s32 1, %s19
      %s36 = scalar_select %p33, %s35, %s19
      %p37 = scmp.ge.s32.totalorder %s36, 2
      %s38 = scalar_select %p37, 0, %s36
      %s39 = ssub.s32 %s19, %s38
      %p40 = scmp.eq.s32.totalorder %s39, 0
      %s42 = sadd.s32 %s41, 1
      %s43 = scalar_select %p40, %s41, %s42
      %p46 = pneg %p40
      %p47 = scmp.eq.s32.totalorder %s12, 3
      %p48 = por %p46, %p47
      %p49 = scmp.ne.s32.totalorder %s41, %s44
      %p50 = scmp.eq.s32.totalorder %s12, 0
      %p51 = por %p49, %p50
      %p52 = scmp.ne.s32.totalorder %s41, %s44
      %p53 = scmp.eq.s32.totalorder %s17, 3
      %p54 = por %p52, %p53
      %p55 = scmp.ne.s32.totalorder %s44, %s45
      %p56 = scmp.eq.s32.totalorder %s17, 0
      %p57 = por %p55, %p56
      %p58 = scmp.ne.s32.totalorder %s44, %s45
      %p59 = scmp.eq.s32.totalorder %s18, 3
      %p60 = por %p58, %p59
      %p62 = scmp.ne.s32.totalorder %s45, %s61
      %p63 = scmp.eq.s32.totalorder %s18, 0
      %p64 = por %p62, %p63
      %s65 = ssub.s32 %s21, %s30
      %p66 = scmp.eq.s32.totalorder %s65, 0
      %s68 = sadd.s32 %s67, 1
      %s69 = scalar_select %p66, %s67, %s68
      %p72 = pneg %p66
      %p73 = scmp.eq.s32.totalorder %s12, 3
      %p74 = por %p72, %p73
      %p75 = scmp.ne.s32.totalorder %s67, %s70
      %p76 = scmp.eq.s32.totalorder %s12, 0
      %p77 = por %p75, %p76
      %p78 = scmp.ne.s32.totalorder %s67, %s70
      %p79 = scmp.eq.s32.totalorder %s17, 3
      %p80 = por %p78, %p79
      %p81 = scmp.ne.s32.totalorder %s70, %s71
      %p82 = scmp.eq.s32.totalorder %s17, 0
      %p83 = por %p81, %p82
      %p84 = scmp.ne.s32.totalorder %s70, %s71
      %p85 = scmp.eq.s32.totalorder %s18, 3
      %p86 = por %p84, %p85
      %p88 = scmp.ne.s32.totalorder %s71, %s87
      %p89 = scmp.eq.s32.totalorder %s18, 0
      %p90 = por %p88, %p89
      %s91 = ssub.s32 %s21, %s30
      %p92 = scmp.eq.s32.totalorder %s91, 0
      %s94 = sadd.s32 %s93, 1
      %s95 = scalar_select %p92, %s93, %s94
      %p98 = pneg %p92
      %p99 = scmp.eq.s32.totalorder %s12, 3
      %p100 = por %p98, %p99
      %p101 = scmp.ne.s32.totalorder %s93, %s96
      %p102 = scmp.eq.s32.totalorder %s12, 0
      %p103 = por %p101, %p102
      %p104 = scmp.ne.s32.totalorder %s93, %s96
      %p105 = scmp.eq.s32.totalorder %s17, 3
      %p106 = por %p104, %p105
      %p107 = scmp.ne.s32.totalorder %s96, %s97
      %p108 = scmp.eq.s32.totalorder %s17, 0
      %p109 = por %p107, %p108
      %p110 = scmp.ne.s32.totalorder %s96, %s97
      %p111 = scmp.eq.s32.totalorder %s18, 3
      %p112 = por %p110, %p111
      %p114 = scmp.ne.s32.totalorder %s97, %s113
      %p115 = scmp.eq.s32.totalorder %s18, 0
      %p116 = por %p114, %p115
      %s117 = ssub.s32 %s19, %s38
      %s118 = ssub.s32 %s20, %s34
      %s119 = sor.u32 %s117, %s118
      %s120 = ssub.s32 %s21, %s30
      %s121 = sor.u32 %s119, %s120
      %p122 = scmp.eq.s32.totalorder %s121, 0
      %s124 = sadd.s32 %s123, 1
      %s125 = scalar_select %p122, %s123, %s124
      %p128 = pneg %p122
      %p129 = scmp.eq.s32.totalorder %s12, 3
      %p130 = por %p128, %p129
      %p131 = scmp.ne.s32.totalorder %s123, %s126
      %p132 = scmp.eq.s32.totalorder %s12, 0
      %p133 = por %p131, %p132
      %p134 = scmp.ne.s32.totalorder %s123, %s126
      %p135 = scmp.eq.s32.totalorder %s17, 3
      %p136 = por %p134, %p135
      %p137 = scmp.ne.s32.totalorder %s126, %s127
      %p138 = scmp.eq.s32.totalorder %s17, 0
      %p139 = por %p137, %p138
      %p140 = scmp.ne.s32.totalorder %s126, %s127
      %p141 = scmp.eq.s32.totalorder %s18, 3
      %p142 = por %p140, %p141
      %p144 = scmp.ne.s32.totalorder %s127, %s143
      %p145 = scmp.eq.s32.totalorder %s18, 0
      %p146 = por %p144, %p145
      %p147 = scmp.le.s32.totalorder 1, %s12
      %p148 = scmp.lt.s32.totalorder %s12, 5
      %p149 = pnand %p147, %p148
      %p150 = pneg %p149
      // Predicated region
      $region9: #{tpu_custom_call.1} parent=5 // pred_check
        _
      $region10: #{tpu_custom_call.1} parent=5 // pred_check_branch
        %152 = sbr.rel (%p149) target = $region12
      $region11: #{tpu_custom_call.1} parent=5 // pred_region
        %s153 = ssub.s32 %s12, 1
        // Predicated region
        $region13: #{tpu_custom_call.1} parent=11 // pred_check
          %p154 = pneg %p83
        $region14: #{tpu_custom_call.1} parent=11 // pred_check_branch
          %156 = sbr.rel (%p154) target = $region16
        $region15: #{tpu_custom_call.1} parent=11 // pred_region
          %p157 = scmp.lt.s32.totalorder %s24, 0
          %s158 = scalar_select %p157, %s24, 0
          %s159 = smul.addr %s158, 4
          %s160 = scalar_lea.vmem %s1, %s159
        $region16: #{tpu_custom_call.1} parent=11 // pred_fallthru
          _
        // Predicated region
        $region17: #{tpu_custom_call.1} parent=11 // pred_check
          %p161 = pneg %p109
        $region18: #{tpu_custom_call.1} parent=11 // pred_check_branch
          %163 = sbr.rel (%p161) target = $region20
        $region19: #{tpu_custom_call.1} parent=11 // pred_region
          %p164 = scmp.lt.s32.totalorder %s24, 0
          %s165 = scalar_select %p164, %s24, 0
          %s166 = scalar_lea.vmem %s2, %s165
        $region20: #{tpu_custom_call.1} parent=11 // pred_fallthru
          _
      $region12: #{tpu_custom_call.1} parent=5 // pred_fallthru
        _
      %p167 = scmp.lt.s32.totalorder %s12, 4
      // Predicated region
      $region21: #{tpu_custom_call.1} parent=5 // pred_check
        %p168 = pneg %p167
      $region22: #{tpu_custom_call.1} parent=5 // pred_check_branch
        %170 = sbr.rel (%p168) target = $region24
      $region23: #{tpu_custom_call.1} parent=5 // pred_region
        // Predicated region
        $region25: #{tpu_custom_call.1} parent=23 // pred_check
          %p171 = pneg %p51
        $region26: #{tpu_custom_call.1} parent=23 // pred_check_branch
          %173 = sbr.rel (%p171) target = $region28
        $region27: #{tpu_custom_call.1} parent=23 // pred_region
          %p174 = scmp.lt.s32.totalorder %s19, 1
          %s175 = scalar_select %p174, %s19, 1
          %s176 = smul.addr %s175, 72
          %s177 = smul.addr %s176, 4
          %s178 = scalar_lea.vmem %s0, %s177
        $region28: #{tpu_custom_call.1} parent=23 // pred_fallthru
          _
      $region24: #{tpu_custom_call.1} parent=5 // pred_fallthru
        _
      %p179 = scmp.le.s32.totalorder 1, %s12
      %p180 = scmp.lt.s32.totalorder %s12, 5
      %p181 = pnand %p179, %p180
      %p182 = pneg %p181
      // Predicated region
      $region29: #{tpu_custom_call.1} parent=5 // pred_check
        _
      $region30: #{tpu_custom_call.1} parent=5 // pred_check_branch
        %184 = sbr.rel (%p181) target = $region32
      $region31: #{tpu_custom_call.1} parent=5 // pred_region
        %s185 = ssub.s32 %s12, 1
        %p186 = scmp.lt.s32.totalorder %s22, 1
        %s187 = scalar_select %p186, %s22, 1
        %s188 = smul.addr %s187, 72
        %s189 = smul.addr %s188, 4
        %s190 = scalar_lea.vmem %s0, %s189
        %p191 = pneg %p57
        %p192 = pneg %p54
        %p193 = scmp.lt.s32.totalorder %s24, 0
        %s194 = scalar_select %p193, %s24, 0
        %s195 = smul.addr %s194, 4
        %s196 = scalar_lea.vmem %s1, %s195
        %p197 = pneg %p83
        %p198 = pneg %p80
        %p199 = scmp.lt.s32.totalorder %s24, 0
        %s200 = scalar_select %p199, %s24, 0
        %s201 = scalar_lea.vmem %s2, %s200
        %p202 = pneg %p109
        %p203 = pneg %p106
        %p204 = pneg %p139
        %p205 = pneg %p136
        %s206 = sand.u32 %s126, 1
        %s207 = scalar_lea.sflag [#allocation4], %s206
        %s208 = sand.u32 %s126, 1
        %s209 = smul.addr %s208, 128
        %s210 = scalar_lea.vmem [#allocation3], %s209
        %p211 = scmp.lt.s32.totalorder %s22, 1
        %s212 = scalar_select %p211, %s22, 1
        %s213 = smul.addr %s212, 72
        %s214 = smul.addr %s213, 4
        %s215 = scalar_lea.vmem %s0, %s214
        %p216 = scmp.lt.s32.totalorder %s24, 0
        %s217 = scalar_select %p216, %s24, 0
        %s218 = smul.addr %s217, 4
        %s219 = scalar_lea.vmem %s1, %s218
        %p220 = scmp.lt.s32.totalorder %s24, 0
        %s221 = scalar_select %p220, %s24, 0
        %s222 = scalar_lea.vmem %s2, %s221
        %s223 = smul.u32 8, %s23
        %s225 = smul.u32 %s23, 8
        %s226 = smul.u32 %s225, 3
        %s227 = smul.addr %s226, 4
        %s228 = scalar_lea.vmem %s215, %s227
        %v229 = vld [vmem:[%s228] sm:$0xf]
        %v230 = vld [vmem:[%s228 + $0x4] sm:$0xf]
        %v231 = vld [vmem:[%s228 + $0x8] sm:$0xf]
        %v232 = vld [vmem:[%s228 + $0xc] sm:$0xf]
        %v233 = vld [vmem:[%s228 + $0x10] sm:$0xf]
        %v234 = vld [vmem:[%s228 + $0x14] sm:$0xf]
        %v235 = vld [vmem:[%s228 + $0x18] sm:$0xf]
        %v236 = vld [vmem:[%s228 + $0x1c] sm:$0xf]
        %v237 = vld [vmem:[%s228 + $0x20] sm:$0xf]
        %v238 = vld [vmem:[%s228 + $0x24] sm:$0xf]
        %v239 = vld [vmem:[%s228 + $0x28] sm:$0xf]
        %v240 = vld [vmem:[%s228 + $0x2c] sm:$0xf]
        %v241 = vld [vmem:[%s228 + $0x30] sm:$0xf]
        %v242 = vld [vmem:[%s228 + $0x34] sm:$0xf]
        %v243 = vld [vmem:[%s228 + $0x38] sm:$0xf]
        %v244 = vld [vmem:[%s228 + $0x3c] sm:$0xf]
        %v245 = vld [vmem:[%s228 + $0x40] sm:$0xf]
        %v246 = vld [vmem:[%s228 + $0x44] sm:$0xf]
        %v247 = vld [vmem:[%s228 + $0x48] sm:$0xf]
        %v248 = vld [vmem:[%s228 + $0x4c] sm:$0xf]
        %v249 = vld [vmem:[%s228 + $0x50] sm:$0xf]
        %v250 = vld [vmem:[%s228 + $0x54] sm:$0xf]
        %v251 = vld [vmem:[%s228 + $0x58] sm:$0xf]
        %v252 = vld [vmem:[%s228 + $0x5c] sm:$0xf]
        %v253 = vld [vmem:[%s228 + $0x60] sm:$0xf]
        %v254 = vld [vmem:[%s228 + $0x64] sm:$0xf]
        %v255 = vld [vmem:[%s228 + $0x68] sm:$0xf]
        %v256 = vld [vmem:[%s228 + $0x6c] sm:$0xf]
        %v257 = vld [vmem:[%s228 + $0x70] sm:$0xf]
        %v258 = vld [vmem:[%s228 + $0x74] sm:$0xf]
        %v259 = vld [vmem:[%s228 + $0x78] sm:$0xf]
        %v260 = vld [vmem:[%s228 + $0x7c] sm:$0xf]
        %v261 = vld [vmem:[%s228 + $0x80] sm:$0xf]
        %v262 = vld [vmem:[%s228 + $0x84] sm:$0xf]
        %v263 = vld [vmem:[%s228 + $0x88] sm:$0xf]
        %v264 = vld [vmem:[%s228 + $0x8c] sm:$0xf]
        %v265 = vld [vmem:[%s228 + $0x90] sm:$0xf]
        %v266 = vld [vmem:[%s228 + $0x94] sm:$0xf]
        %v267 = vld [vmem:[%s228 + $0x98] sm:$0xf]
        %v268 = vld [vmem:[%s228 + $0x9c] sm:$0xf]
        %v269 = vld [vmem:[%s228 + $0xa0] sm:$0xf]
        %v270 = vld [vmem:[%s228 + $0xa4] sm:$0xf]
        %v271 = vld [vmem:[%s228 + $0xa8] sm:$0xf]
        %v272 = vld [vmem:[%s228 + $0xac] sm:$0xf]
        %v273 = vld [vmem:[%s228 + $0xb0] sm:$0xf]
        %v274 = vld [vmem:[%s228 + $0xb4] sm:$0xf]
        %v275 = vld [vmem:[%s228 + $0xb8] sm:$0xf]
        %v276 = vld [vmem:[%s228 + $0xbc] sm:$0xf]
        %vm277 = vsmask.f32 2304
        %vm278 = vsmask.f32 6416
        %vm279 = vmor %vm277, %vm278
        %v281 = vshrl.u32 %v238, 16
        %v283 = vrot.slane %v281, 5
        %v284 = vshll.u32 %v238, 16
        %v286 = vrot.slane %v284, 6
        %v287 = vor.u32 %v283, %v286
        %v288 = vrot.slane %v287, 4
        %v290 = vshrl.u32 %v239, 16
        %v292 = vrot.slane %v290, 5
        %v293 = vshll.u32 %v239, 16
        %v295 = vrot.slane %v293, 6
        %v296 = vor.u32 %v292, %v295
        %v297 = vsel %vm279, %v288, %v296
        %v298 = vrot.slane %v296, 4
        %v300 = vshrl.u32 %v240, 16
        %v302 = vrot.slane %v300, 5
        %v303 = vshll.u32 %v240, 16
        %v305 = vrot.slane %v303, 6
        %v306 = vor.u32 %v302, %v305
        %v307 = vsel %vm279, %v298, %v306
        %v309 = vshrl.u32 %v241, 16
        %v311 = vrot.slane %v309, 5
        %v312 = vshll.u32 %v241, 16
        %v314 = vrot.slane %v312, 6
        %v315 = vor.u32 %v311, %v314
        %v316 = vrot.slane %v315, 4
        %v318 = vshrl.u32 %v242, 16
        %v320 = vrot.slane %v318, 5
        %v321 = vshll.u32 %v242, 16
        %v323 = vrot.slane %v321, 6
        %v324 = vor.u32 %v320, %v323
        %v325 = vsel %vm279, %v316, %v324
        %v326 = vrot.slane %v324, 4
        %v328 = vshrl.u32 %v243, 16
        %v330 = vrot.slane %v328, 5
        %v331 = vshll.u32 %v243, 16
        %v333 = vrot.slane %v331, 6
        %v334 = vor.u32 %v330, %v333
        %v335 = vsel %vm279, %v326, %v334
        %v337 = vshrl.u32 %v244, 16
        %v339 = vrot.slane %v337, 5
        %v340 = vshll.u32 %v244, 16
        %v342 = vrot.slane %v340, 6
        %v343 = vor.u32 %v339, %v342
        %v344 = vrot.slane %v343, 4
        %v346 = vshrl.u32 %v245, 16
        %v348 = vrot.slane %v346, 5
        %v349 = vshll.u32 %v245, 16
        %v351 = vrot.slane %v349, 6
        %v352 = vor.u32 %v348, %v351
        %v353 = vsel %vm279, %v344, %v352
        %v354 = vrot.slane %v352, 4
        %v356 = vshrl.u32 %v246, 16
        %v358 = vrot.slane %v356, 5
        %v359 = vshll.u32 %v246, 16
        %v361 = vrot.slane %v359, 6
        %v362 = vor.u32 %v358, %v361
        %v363 = vsel %vm279, %v354, %v362
        %v365 = vshrl.u32 %v247, 16
        %v367 = vrot.slane %v365, 5
        %v368 = vshll.u32 %v247, 16
        %v370 = vrot.slane %v368, 6
        %v371 = vor.u32 %v367, %v370
        %v372 = vrot.slane %v371, 4
        %v374 = vshrl.u32 %v248, 16
        %v376 = vrot.slane %v374, 5
        %v377 = vshll.u32 %v248, 16
        %v379 = vrot.slane %v377, 6
        %v380 = vor.u32 %v376, %v379
        %v381 = vsel %vm279, %v372, %v380
        %v382 = vrot.slane %v380, 4
        %v384 = vshrl.u32 %v249, 16
        %v386 = vrot.slane %v384, 5
        %v387 = vshll.u32 %v249, 16
        %v389 = vrot.slane %v387, 6
        %v390 = vor.u32 %v386, %v389
        %v391 = vsel %vm279, %v382, %v390
        %v393 = vshrl.u32 %v250, 16
        %v395 = vrot.slane %v393, 5
        %v396 = vshll.u32 %v250, 16
        %v398 = vrot.slane %v396, 6
        %v399 = vor.u32 %v395, %v398
        %v400 = vrot.slane %v399, 4
        %v402 = vshrl.u32 %v251, 16
        %v404 = vrot.slane %v402, 5
        %v405 = vshll.u32 %v251, 16
        %v407 = vrot.slane %v405, 6
        %v408 = vor.u32 %v404, %v407
        %v409 = vsel %vm279, %v400, %v408
        %v410 = vrot.slane %v408, 4
        %v412 = vshrl.u32 %v252, 16
        %v414 = vrot.slane %v412, 5
        %v415 = vshll.u32 %v252, 16
        %v417 = vrot.slane %v415, 6
        %v418 = vor.u32 %v414, %v417
        %v419 = vsel %vm279, %v410, %v418
        %v421 = vshrl.u32 %v253, 16
        %v423 = vrot.slane %v421, 5
        %v424 = vshll.u32 %v253, 16
        %v426 = vrot.slane %v424, 6
        %v427 = vor.u32 %v423, %v426
        %v428 = vrot.slane %v427, 4
        %v430 = vshrl.u32 %v254, 16
        %v432 = vrot.slane %v430, 5
        %v433 = vshll.u32 %v254, 16
        %v435 = vrot.slane %v433, 6
        %v436 = vor.u32 %v432, %v435
        %v437 = vsel %vm279, %v428, %v436
        %v438 = vrot.slane %v436, 4
        %v440 = vshrl.u32 %v255, 16
        %v442 = vrot.slane %v440, 5
        %v443 = vshll.u32 %v255, 16
        %v445 = vrot.slane %v443, 6
        %v446 = vor.u32 %v442, %v445
        %v447 = vsel %vm279, %v438, %v446
        %v449 = vshrl.u32 %v256, 16
        %v451 = vrot.slane %v449, 5
        %v452 = vshll.u32 %v256, 16
        %v454 = vrot.slane %v452, 6
        %v455 = vor.u32 %v451, %v454
        %v456 = vrot.slane %v455, 4
        %v458 = vshrl.u32 %v257, 16
        %v460 = vrot.slane %v458, 5
        %v461 = vshll.u32 %v257, 16
        %v463 = vrot.slane %v461, 6
        %v464 = vor.u32 %v460, %v463
        %v465 = vsel %vm279, %v456, %v464
        %v466 = vrot.slane %v464, 4
        %v468 = vshrl.u32 %v258, 16
        %v470 = vrot.slane %v468, 5
        %v471 = vshll.u32 %v258, 16
        %v473 = vrot.slane %v471, 6
        %v474 = vor.u32 %v470, %v473
        %v475 = vsel %vm279, %v466, %v474
        %v477 = vshrl.u32 %v259, 16
        %v479 = vrot.slane %v477, 5
        %v480 = vshll.u32 %v259, 16
        %v482 = vrot.slane %v480, 6
        %v483 = vor.u32 %v479, %v482
        %v484 = vrot.slane %v483, 4
        %v486 = vshrl.u32 %v260, 16
        %v488 = vrot.slane %v486, 5
        %v489 = vshll.u32 %v260, 16
        %v491 = vrot.slane %v489, 6
        %v492 = vor.u32 %v488, %v491
        %v493 = vsel %vm279, %v484, %v492
        %v494 = vrot.slane %v492, 4
        %v496 = vshrl.u32 %v261, 16
        %v498 = vrot.slane %v496, 5
        %v499 = vshll.u32 %v261, 16
        %v501 = vrot.slane %v499, 6
        %v502 = vor.u32 %v498, %v501
        %v503 = vsel %vm279, %v494, %v502
        %v504 = vunpack.c.l.b16 %v297
        %v505 = vunpack.c.l.b16 %v307
        %v506 = vunpack.c.l.b16 %v325
        %v507 = vunpack.c.l.b16 %v335
        %v508 = vunpack.c.l.b16 %v353
        %v509 = vunpack.c.l.b16 %v363
        %v510 = vunpack.c.l.b16 %v381
        %v511 = vunpack.c.l.b16 %v391
        %v512 = vunpack.c.l.b16 %v409
        %v513 = vunpack.c.l.b16 %v419
        %v514 = vunpack.c.l.b16 %v437
        %v515 = vunpack.c.l.b16 %v447
        %v516 = vunpack.c.l.b16 %v465
        %v517 = vunpack.c.l.b16 %v475
        %v518 = vunpack.c.l.b16 %v493
        %v519 = vunpack.c.l.b16 %v503
        %v520 = vpack.c.b16 %v505, %v504
        %v521 = vpack.c.b16 %v507, %v506
        %v522 = vpack.c.b16 %v509, %v508
        %v523 = vpack.c.b16 %v511, %v510
        %v524 = vpack.c.b16 %v513, %v512
        %v525 = vpack.c.b16 %v515, %v514
        %v526 = vpack.c.b16 %v517, %v516
        %v527 = vpack.c.b16 %v519, %v518
        %vm536 = vcmask 31744
        %537 = vst.msk [vmem:[#allocation2] sm:$0xff] %vm536, %v520
        %538 = vst.msk [vmem:[#allocation2 + $0x8] sm:$0xff] %vm536, %v521
        %539 = vst.msk [vmem:[#allocation2 + $0x10] sm:$0xff] %vm536, %v522
        %540 = vst.msk [vmem:[#allocation2 + $0x18] sm:$0xff] %vm536, %v523
        %541 = vst.msk [vmem:[#allocation2 + $0x20] sm:$0xff] %vm536, %v524
        %542 = vst.msk [vmem:[#allocation2 + $0x28] sm:$0xff] %vm536, %v525
        %543 = vst.msk [vmem:[#allocation2 + $0x30] sm:$0xff] %vm536, %v526
        %544 = vst.msk [vmem:[#allocation2 + $0x38] sm:$0xff] %vm536, %v527
        %vm569 = vcmask 1041408
        %vm570 = vcmask 1045508
        %vm571 = vmor %vm569, %vm570
        %v572 = vrot.slane %v238, 6
        %v573 = vrot.slane %v572, 4
        %v574 = vrot.slane %v239, 6
        %v575 = vsel %vm571, %v573, %v574
        %v576 = vrot.slane %v574, 4
        %v577 = vrot.slane %v240, 6
        %v578 = vsel %vm571, %v576, %v577
        %v579 = vrot.slane %v241, 6
        %v580 = vrot.slane %v579, 4
        %v581 = vrot.slane %v242, 6
        %v582 = vsel %vm571, %v580, %v581
        %v583 = vrot.slane %v581, 4
        %v584 = vrot.slane %v243, 6
        %v585 = vsel %vm571, %v583, %v584
        %v586 = vrot.slane %v244, 6
        %v587 = vrot.slane %v586, 4
        %v588 = vrot.slane %v245, 6
        %v589 = vsel %vm571, %v587, %v588
        %v590 = vrot.slane %v588, 4
        %v591 = vrot.slane %v246, 6
        %v592 = vsel %vm571, %v590, %v591
        %v593 = vrot.slane %v247, 6
        %v594 = vrot.slane %v593, 4
        %v595 = vrot.slane %v248, 6
        %v596 = vsel %vm571, %v594, %v595
        %v597 = vrot.slane %v595, 4
        %v598 = vrot.slane %v249, 6
        %v599 = vsel %vm571, %v597, %v598
        %v600 = vrot.slane %v250, 6
        %v601 = vrot.slane %v600, 4
        %v602 = vrot.slane %v251, 6
        %v603 = vsel %vm571, %v601, %v602
        %v604 = vrot.slane %v602, 4
        %v605 = vrot.slane %v252, 6
        %v606 = vsel %vm571, %v604, %v605
        %v607 = vrot.slane %v253, 6
        %v608 = vrot.slane %v607, 4
        %v609 = vrot.slane %v254, 6
        %v610 = vsel %vm571, %v608, %v609
        %v611 = vrot.slane %v609, 4
        %v612 = vrot.slane %v255, 6
        %v613 = vsel %vm571, %v611, %v612
        %v614 = vrot.slane %v256, 6
        %v615 = vrot.slane %v614, 4
        %v616 = vrot.slane %v257, 6
        %v617 = vsel %vm571, %v615, %v616
        %v618 = vrot.slane %v616, 4
        %v619 = vrot.slane %v258, 6
        %v620 = vsel %vm571, %v618, %v619
        %v621 = vrot.slane %v259, 6
        %v622 = vrot.slane %v621, 4
        %v623 = vrot.slane %v260, 6
        %v624 = vsel %vm571, %v622, %v623
        %v625 = vrot.slane %v623, 4
        %v626 = vrot.slane %v261, 6
        %v627 = vsel %vm571, %v625, %v626
        %v628 = vunpack.c.l.b16 %v575
        %v629 = vunpack.c.l.b16 %v578
        %v630 = vunpack.c.l.b16 %v582
        %v631 = vunpack.c.l.b16 %v585
        %v632 = vunpack.c.l.b16 %v589
        %v633 = vunpack.c.l.b16 %v592
        %v634 = vunpack.c.l.b16 %v596
        %v635 = vunpack.c.l.b16 %v599
        %v636 = vunpack.c.l.b16 %v603
        %v637 = vunpack.c.l.b16 %v606
        %v638 = vunpack.c.l.b16 %v610
        %v639 = vunpack.c.l.b16 %v613
        %v640 = vunpack.c.l.b16 %v617
        %v641 = vunpack.c.l.b16 %v620
        %v642 = vunpack.c.l.b16 %v624
        %v643 = vunpack.c.l.b16 %v627
        %v644 = vpack.c.b16 %v629, %v628
        %v645 = vpack.c.b16 %v631, %v630
        %v646 = vpack.c.b16 %v633, %v632
        %v647 = vpack.c.b16 %v635, %v634
        %v648 = vpack.c.b16 %v637, %v636
        %v649 = vpack.c.b16 %v639, %v638
        %v650 = vpack.c.b16 %v641, %v640
        %v651 = vpack.c.b16 %v643, %v642
        %652 = vrot.lane.b32.xlu0 %v644, 4
        %v653 = vpop.permute.xlu0 %652
        %654 = vrot.lane.b32.xlu0 %v645, 4
        %v655 = vpop.permute.xlu0 %654
        %656 = vrot.lane.b32.xlu0 %v646, 4
        %v657 = vpop.permute.xlu0 %656
        %658 = vrot.lane.b32.xlu0 %v647, 4
        %v659 = vpop.permute.xlu0 %658
        %660 = vrot.lane.b32.xlu0 %v648, 4
        %v661 = vpop.permute.xlu0 %660
        %662 = vrot.lane.b32.xlu0 %v649, 4
        %v663 = vpop.permute.xlu0 %662
        %664 = vrot.lane.b32.xlu0 %v650, 4
        %v665 = vpop.permute.xlu0 %664
        %666 = vrot.lane.b32.xlu0 %v651, 4
        %v667 = vpop.permute.xlu0 %666
        %vm676 = vcmask 64544
        %677 = vst.msk [vmem:[#allocation2] sm:$0xff] %vm676, %v653
        %678 = vst.msk [vmem:[#allocation2 + $0x8] sm:$0xff] %vm676, %v655
        %679 = vst.msk [vmem:[#allocation2 + $0x10] sm:$0xff] %vm676, %v657
        %680 = vst.msk [vmem:[#allocation2 + $0x18] sm:$0xff] %vm676, %v659
        %681 = vst.msk [vmem:[#allocation2 + $0x20] sm:$0xff] %vm676, %v661
        %682 = vst.msk [vmem:[#allocation2 + $0x28] sm:$0xff] %vm676, %v663
        %683 = vst.msk [vmem:[#allocation2 + $0x30] sm:$0xff] %vm676, %v665
        %684 = vst.msk [vmem:[#allocation2 + $0x38] sm:$0xff] %vm676, %v667
        %vm685 = vsmask.f32 1280
        %vm686 = vsmask.f32 5392
        %vm687 = vmor %vm685, %vm686
        %v688 = vrot.slane %v281, 6
        %v689 = vrot.slane %v284, 7
        %v690 = vor.u32 %v688, %v689
        %v691 = vrot.slane %v690, 4
        %v692 = vrot.slane %v290, 6
        %v693 = vrot.slane %v293, 7
        %v694 = vor.u32 %v692, %v693
        %v695 = vsel %vm687, %v691, %v694
        %v696 = vrot.slane %v694, 4
        %v697 = vrot.slane %v300, 6
        %v698 = vrot.slane %v303, 7
        %v699 = vor.u32 %v697, %v698
        %v700 = vsel %vm687, %v696, %v699
        %v701 = vrot.slane %v309, 6
        %v702 = vrot.slane %v312, 7
        %v703 = vor.u32 %v701, %v702
        %v704 = vrot.slane %v703, 4
        %v705 = vrot.slane %v318, 6
        %v706 = vrot.slane %v321, 7
        %v707 = vor.u32 %v705, %v706
        %v708 = vsel %vm687, %v704, %v707
        %v709 = vrot.slane %v707, 4
        %v710 = vrot.slane %v328, 6
        %v711 = vrot.slane %v331, 7
        %v712 = vor.u32 %v710, %v711
        %v713 = vsel %vm687, %v709, %v712
        %v714 = vrot.slane %v337, 6
        %v715 = vrot.slane %v340, 7
        %v716 = vor.u32 %v714, %v715
        %v717 = vrot.slane %v716, 4
        %v718 = vrot.slane %v346, 6
        %v719 = vrot.slane %v349, 7
        %v720 = vor.u32 %v718, %v719
        %v721 = vsel %vm687, %v717, %v720
        %v722 = vrot.slane %v720, 4
        %v723 = vrot.slane %v356, 6
        %v724 = vrot.slane %v359, 7
        %v725 = vor.u32 %v723, %v724
        %v726 = vsel %vm687, %v722, %v725
        %v727 = vrot.slane %v365, 6
        %v728 = vrot.slane %v368, 7
        %v729 = vor.u32 %v727, %v728
        %v730 = vrot.slane %v729, 4
        %v731 = vrot.slane %v374, 6
        %v732 = vrot.slane %v377, 7
        %v733 = vor.u32 %v731, %v732
        %v734 = vsel %vm687, %v730, %v733
        %v735 = vrot.slane %v733, 4
        %v736 = vrot.slane %v384, 6
        %v737 = vrot.slane %v387, 7
        %v738 = vor.u32 %v736, %v737
        %v739 = vsel %vm687, %v735, %v738
        %v740 = vrot.slane %v393, 6
        %v741 = vrot.slane %v396, 7
        %v742 = vor.u32 %v740, %v741
        %v743 = vrot.slane %v742, 4
        %v744 = vrot.slane %v402, 6
        %v745 = vrot.slane %v405, 7
        %v746 = vor.u32 %v744, %v745
        %v747 = vsel %vm687, %v743, %v746
        %v748 = vrot.slane %v746, 4
        %v749 = vrot.slane %v412, 6
        %v750 = vrot.slane %v415, 7
        %v751 = vor.u32 %v749, %v750
        %v752 = vsel %vm687, %v748, %v751
        %v753 = vrot.slane %v421, 6
        %v754 = vrot.slane %v424, 7
        %v755 = vor.u32 %v753, %v754
        %v756 = vrot.slane %v755, 4
        %v757 = vrot.slane %v430, 6
        %v758 = vrot.slane %v433, 7
        %v759 = vor.u32 %v757, %v758
        %v760 = vsel %vm687, %v756, %v759
        %v761 = vrot.slane %v759, 4
        %v762 = vrot.slane %v440, 6
        %v763 = vrot.slane %v443, 7
        %v764 = vor.u32 %v762, %v763
        %v765 = vsel %vm687, %v761, %v764
        %v766 = vrot.slane %v449, 6
        %v767 = vrot.slane %v452, 7
        %v768 = vor.u32 %v766, %v767
        %v769 = vrot.slane %v768, 4
        %v770 = vrot.slane %v458, 6
        %v771 = vrot.slane %v461, 7
        %v772 = vor.u32 %v770, %v771
        %v773 = vsel %vm687, %v769, %v772
        %v774 = vrot.slane %v772, 4
        %v775 = vrot.slane %v468, 6
        %v776 = vrot.slane %v471, 7
        %v777 = vor.u32 %v775, %v776
        %v778 = vsel %vm687, %v774, %v777
        %v779 = vrot.slane %v477, 6
        %v780 = vrot.slane %v480, 7
        %v781 = vor.u32 %v779, %v780
        %v782 = vrot.slane %v781, 4
        %v783 = vrot.slane %v486, 6
        %v784 = vrot.slane %v489, 7
        %v785 = vor.u32 %v783, %v784
        %v786 = vsel %vm687, %v782, %v785
        %v787 = vrot.slane %v785, 4
        %v788 = vrot.slane %v496, 6
        %v789 = vrot.slane %v499, 7
        %v790 = vor.u32 %v788, %v789
        %v791 = vsel %vm687, %v787, %v790
        %v792 = vunpack.c.l.b16 %v695
        %v793 = vunpack.c.l.b16 %v700
        %v794 = vunpack.c.l.b16 %v708
        %v795 = vunpack.c.l.b16 %v713
        %v796 = vunpack.c.l.b16 %v721
        %v797 = vunpack.c.l.b16 %v726
        %v798 = vunpack.c.l.b16 %v734
        %v799 = vunpack.c.l.b16 %v739
        %v800 = vunpack.c.l.b16 %v747
        %v801 = vunpack.c.l.b16 %v752
        %v802 = vunpack.c.l.b16 %v760
        %v803 = vunpack.c.l.b16 %v765
        %v804 = vunpack.c.l.b16 %v773
        %v805 = vunpack.c.l.b16 %v778
        %v806 = vunpack.c.l.b16 %v786
        %v807 = vunpack.c.l.b16 %v791
        %v808 = vpack.c.b16 %v793, %v792
        %v809 = vpack.c.b16 %v795, %v794
        %v810 = vpack.c.b16 %v797, %v796
        %v811 = vpack.c.b16 %v799, %v798
        %v812 = vpack.c.b16 %v801, %v800
        %v813 = vpack.c.b16 %v803, %v802
        %v814 = vpack.c.b16 %v805, %v804
        %v815 = vpack.c.b16 %v807, %v806
        %816 = vrot.lane.b32.xlu0 %v808, 8
        %v817 = vpop.permute.xlu0 %816
        %818 = vrot.lane.b32.xlu0 %v809, 8
        %v819 = vpop.permute.xlu0 %818
        %820 = vrot.lane.b32.xlu0 %v810, 8
        %v821 = vpop.permute.xlu0 %820
        %822 = vrot.lane.b32.xlu0 %v811, 8
        %v823 = vpop.permute.xlu0 %822
        %824 = vrot.lane.b32.xlu0 %v812, 8
        %v825 = vpop.permute.xlu0 %824
        %826 = vrot.lane.b32.xlu0 %v813, 8
        %v827 = vpop.permute.xlu0 %826
        %828 = vrot.lane.b32.xlu0 %v814, 8
        %v829 = vpop.permute.xlu0 %828
        %830 = vrot.lane.b32.xlu0 %v815, 8
        %v831 = vpop.permute.xlu0 %830
        %vm840 = vcmask 97344
        %841 = vst.msk [vmem:[#allocation2] sm:$0xff] %vm840, %v817
        %842 = vst.msk [vmem:[#allocation2 + $0x8] sm:$0xff] %vm840, %v819
        %843 = vst.msk [vmem:[#allocation2 + $0x10] sm:$0xff] %vm840, %v821
        %844 = vst.msk [vmem:[#allocation2 + $0x18] sm:$0xff] %vm840, %v823
        %845 = vst.msk [vmem:[#allocation2 + $0x20] sm:$0xff] %vm840, %v825
        %846 = vst.msk [vmem:[#allocation2 + $0x28] sm:$0xff] %vm840, %v827
        %847 = vst.msk [vmem:[#allocation2 + $0x30] sm:$0xff] %vm840, %v829
        %848 = vst.msk [vmem:[#allocation2 + $0x38] sm:$0xff] %vm840, %v831
        %v850 = vshrl.u32 %v262, 16
        %v852 = vrot.slane %v850, 5
        %v853 = vshll.u32 %v262, 16
        %v855 = vrot.slane %v853, 6
        %v856 = vor.u32 %v852, %v855
        %v857 = vrot.slane %v856, 4
        %v859 = vshrl.u32 %v263, 16
        %v861 = vrot.slane %v859, 5
        %v862 = vshll.u32 %v263, 16
        %v864 = vrot.slane %v862, 6
        %v865 = vor.u32 %v861, %v864
        %v866 = vsel %vm279, %v857, %v865
        %v867 = vrot.slane %v865, 4
        %v869 = vshrl.u32 %v264, 16
        %v871 = vrot.slane %v869, 5
        %v872 = vshll.u32 %v264, 16
        %v874 = vrot.slane %v872, 6
        %v875 = vor.u32 %v871, %v874
        %v876 = vsel %vm279, %v867, %v875
        %v877 = vunpack.c.l.b16 %v866
        %v878 = vunpack.c.l.b16 %v876
        %v879 = vpack.c.b16 %v878, %v877
        %880 = vrot.lane.b32.xlu0 %v521, 12
        %v881 = vpop.permute.xlu0 %880
        %882 = vrot.lane.b32.xlu0 %v522, 12
        %v883 = vpop.permute.xlu0 %882
        %884 = vrot.lane.b32.xlu0 %v523, 12
        %v885 = vpop.permute.xlu0 %884
        %886 = vrot.lane.b32.xlu0 %v524, 12
        %v887 = vpop.permute.xlu0 %886
        %888 = vrot.lane.b32.xlu0 %v525, 12
        %v889 = vpop.permute.xlu0 %888
        %890 = vrot.lane.b32.xlu0 %v526, 12
        %v891 = vpop.permute.xlu0 %890
        %892 = vrot.lane.b32.xlu0 %v527, 12
        %v893 = vpop.permute.xlu0 %892
        %894 = vrot.lane.b32.xlu0 %v879, 12
        %v895 = vpop.permute.xlu0 %894
        %vm904 = vcmask 130144
        %905 = vst.msk [vmem:[#allocation2] sm:$0xff] %vm904, %v881
        %906 = vst.msk [vmem:[#allocation2 + $0x8] sm:$0xff] %vm904, %v883
        %907 = vst.msk [vmem:[#allocation2 + $0x10] sm:$0xff] %vm904, %v885
        %908 = vst.msk [vmem:[#allocation2 + $0x18] sm:$0xff] %vm904, %v887
        %909 = vst.msk [vmem:[#allocation2 + $0x20] sm:$0xff] %vm904, %v889
        %910 = vst.msk [vmem:[#allocation2 + $0x28] sm:$0xff] %vm904, %v891
        %911 = vst.msk [vmem:[#allocation2 + $0x30] sm:$0xff] %vm904, %v893
        %912 = vst.msk [vmem:[#allocation2 + $0x38] sm:$0xff] %vm904, %v895
        %v916 = vrot.slane %v262, 6
        %v917 = vrot.slane %v916, 4
        %v918 = vrot.slane %v263, 6
        %v919 = vsel %vm571, %v917, %v918
        %v920 = vrot.slane %v918, 4
        %v921 = vrot.slane %v264, 6
        %v922 = vsel %vm571, %v920, %v921
        %v923 = vunpack.c.l.b16 %v919
        %v924 = vunpack.c.l.b16 %v922
        %v925 = vpack.c.b16 %v924, %v923
        %926 = vrot.lane.b32.xlu0 %v645, 16
        %v927 = vpop.permute.xlu0 %926
        %928 = vrot.lane.b32.xlu0 %v646, 16
        %v929 = vpop.permute.xlu0 %928
        %930 = vrot.lane.b32.xlu0 %v647, 16
        %v931 = vpop.permute.xlu0 %930
        %932 = vrot.lane.b32.xlu0 %v648, 16
        %v933 = vpop.permute.xlu0 %932
        %934 = vrot.lane.b32.xlu0 %v649, 16
        %v935 = vpop.permute.xlu0 %934
        %936 = vrot.lane.b32.xlu0 %v650, 16
        %v937 = vpop.permute.xlu0 %936
        %938 = vrot.lane.b32.xlu0 %v651, 16
        %v939 = vpop.permute.xlu0 %938
        %940 = vrot.lane.b32.xlu0 %v925, 16
        %v941 = vpop.permute.xlu0 %940
        %vm950 = vcmask 162944
        %951 = vst.msk [vmem:[#allocation2] sm:$0xff] %vm950, %v927
        %952 = vst.msk [vmem:[#allocation2 + $0x8] sm:$0xff] %vm950, %v929
        %953 = vst.msk [vmem:[#allocation2 + $0x10] sm:$0xff] %vm950, %v931
        %954 = vst.msk [vmem:[#allocation2 + $0x18] sm:$0xff] %vm950, %v933
        %955 = vst.msk [vmem:[#allocation2 + $0x20] sm:$0xff] %vm950, %v935
        %956 = vst.msk [vmem:[#allocation2 + $0x28] sm:$0xff] %vm950, %v937
        %957 = vst.msk [vmem:[#allocation2 + $0x30] sm:$0xff] %vm950, %v939
        %958 = vst.msk [vmem:[#allocation2 + $0x38] sm:$0xff] %vm950, %v941
        %v959 = vrot.slane %v850, 6
        %v960 = vrot.slane %v853, 7
        %v961 = vor.u32 %v959, %v960
        %v962 = vrot.slane %v961, 4
        %v963 = vrot.slane %v859, 6
        %v964 = vrot.slane %v862, 7
        %v965 = vor.u32 %v963, %v964
        %v966 = vsel %vm687, %v962, %v965
        %v967 = vrot.slane %v965, 4
        %v968 = vrot.slane %v869, 6
        %v969 = vrot.slane %v872, 7
        %v970 = vor.u32 %v968, %v969
        %v971 = vsel %vm687, %v967, %v970
        %v972 = vunpack.c.l.b16 %v966
        %v973 = vunpack.c.l.b16 %v971
        %v974 = vpack.c.b16 %v973, %v972
        %975 = vrot.lane.b32.xlu0 %v809, 20
        %v976 = vpop.permute.xlu0 %975
        %977 = vrot.lane.b32.xlu0 %v810, 20
        %v978 = vpop.permute.xlu0 %977
        %979 = vrot.lane.b32.xlu0 %v811, 20
        %v980 = vpop.permute.xlu0 %979
        %981 = vrot.lane.b32.xlu0 %v812, 20
        %v982 = vpop.permute.xlu0 %981
        %983 = vrot.lane.b32.xlu0 %v813, 20
        %v984 = vpop.permute.xlu0 %983
        %985 = vrot.lane.b32.xlu0 %v814, 20
        %v986 = vpop.permute.xlu0 %985
        %987 = vrot.lane.b32.xlu0 %v815, 20
        %v988 = vpop.permute.xlu0 %987
        %989 = vrot.lane.b32.xlu0 %v974, 20
        %v990 = vpop.permute.xlu0 %989
        %vm999 = vcmask 195744
        %1000 = vst.msk [vmem:[#allocation2] sm:$0xff] %vm999, %v976
        %1001 = vst.msk [vmem:[#allocation2 + $0x8] sm:$0xff] %vm999, %v978
        %1002 = vst.msk [vmem:[#allocation2 + $0x10] sm:$0xff] %vm999, %v980
        %1003 = vst.msk [vmem:[#allocation2 + $0x18] sm:$0xff] %vm999, %v982
        %1004 = vst.msk [vmem:[#allocation2 + $0x20] sm:$0xff] %vm999, %v984
        %1005 = vst.msk [vmem:[#allocation2 + $0x28] sm:$0xff] %vm999, %v986
        %1006 = vst.msk [vmem:[#allocation2 + $0x30] sm:$0xff] %vm999, %v988
        %1007 = vst.msk [vmem:[#allocation2 + $0x38] sm:$0xff] %vm999, %v990
        %v1009 = vshrl.u32 %v265, 16
        %v1011 = vrot.slane %v1009, 5
        %v1012 = vshll.u32 %v265, 16
        %v1014 = vrot.slane %v1012, 6
        %v1015 = vor.u32 %v1011, %v1014
        %v1016 = vrot.slane %v1015, 4
        %v1018 = vshrl.u32 %v266, 16
        %v1020 = vrot.slane %v1018, 5
        %v1021 = vshll.u32 %v266, 16
        %v1023 = vrot.slane %v1021, 6
        %v1024 = vor.u32 %v1020, %v1023
        %v1025 = vsel %vm279, %v1016, %v1024
        %v1026 = vrot.slane %v1024, 4
        %v1028 = vshrl.u32 %v267, 16
        %v1030 = vrot.slane %v1028, 5
        %v1031 = vshll.u32 %v267, 16
        %v1033 = vrot.slane %v1031, 6
        %v1034 = vor.u32 %v1030, %v1033
        %v1035 = vsel %vm279, %v1026, %v1034
        %v1036 = vunpack.c.l.b16 %v1025
        %v1037 = vunpack.c.l.b16 %v1035
        %v1038 = vpack.c.b16 %v1037, %v1036
        %1039 = vrot.lane.b32.xlu0 %v522, 24
        %v1040 = vpop.permute.xlu0 %1039
        %1041 = vrot.lane.b32.xlu0 %v523, 24
        %v1042 = vpop.permute.xlu0 %1041
        %1043 = vrot.lane.b32.xlu0 %v524, 24
        %v1044 = vpop.permute.xlu0 %1043
        %1045 = vrot.lane.b32.xlu0 %v525, 24
        %v1046 = vpop.permute.xlu0 %1045
        %1047 = vrot.lane.b32.xlu0 %v526, 24
        %v1048 = vpop.permute.xlu0 %1047
        %1049 = vrot.lane.b32.xlu0 %v527, 24
        %v1050 = vpop.permute.xlu0 %1049
        %1051 = vrot.lane.b32.xlu0 %v879, 24
        %v1052 = vpop.permute.xlu0 %1051
        %1053 = vrot.lane.b32.xlu0 %v1038, 24
        %v1054 = vpop.permute.xlu0 %1053
        %vm1063 = vcmask 228544
        %1064 = vst.msk [vmem:[#allocation2] sm:$0xff] %vm1063, %v1040
        %1065 = vst.msk [vmem:[#allocation2 + $0x8] sm:$0xff] %vm1063, %v1042
        %1066 = vst.msk [vmem:[#allocation2 + $0x10] sm:$0xff] %vm1063, %v1044
        %1067 = vst.msk [vmem:[#allocation2 + $0x18] sm:$0xff] %vm1063, %v1046
        %1068 = vst.msk [vmem:[#allocation2 + $0x20] sm:$0xff] %vm1063, %v1048
        %1069 = vst.msk [vmem:[#allocation2 + $0x28] sm:$0xff] %vm1063, %v1050
        %1070 = vst.msk [vmem:[#allocation2 + $0x30] sm:$0xff] %vm1063, %v1052
        %1071 = vst.msk [vmem:[#allocation2 + $0x38] sm:$0xff] %vm1063, %v1054
        %v1075 = vrot.slane %v265, 6
        %v1076 = vrot.slane %v1075, 4
        %v1077 = vrot.slane %v266, 6
        %v1078 = vsel %vm571, %v1076, %v1077
        %v1079 = vrot.slane %v1077, 4
        %v1080 = vrot.slane %v267, 6
        %v1081 = vsel %vm571, %v1079, %v1080
        %v1082 = vunpack.c.l.b16 %v1078
        %v1083 = vunpack.c.l.b16 %v1081
        %v1084 = vpack.c.b16 %v1083, %v1082
        %1085 = vrot.lane.b32.xlu0 %v646, 28
        %v1086 = vpop.permute.xlu0 %1085
        %1087 = vrot.lane.b32.xlu0 %v647, 28
        %v1088 = vpop.permute.xlu0 %1087
        %1089 = vrot.lane.b32.xlu0 %v648, 28
        %v1090 = vpop.permute.xlu0 %1089
        %1091 = vrot.lane.b32.xlu0 %v649, 28
        %v1092 = vpop.permute.xlu0 %1091
        %1093 = vrot.lane.b32.xlu0 %v650, 28
        %v1094 = vpop.permute.xlu0 %1093
        %1095 = vrot.lane.b32.xlu0 %v651, 28
        %v1096 = vpop.permute.xlu0 %1095
        %1097 = vrot.lane.b32.xlu0 %v925, 28
        %v1098 = vpop.permute.xlu0 %1097
        %1099 = vrot.lane.b32.xlu0 %v1084, 28
        %v1100 = vpop.permute.xlu0 %1099
        %vm1109 = vcmask 261344
        %1110 = vst.msk [vmem:[#allocation2] sm:$0xff] %vm1109, %v1086
        %1111 = vst.msk [vmem:[#allocation2 + $0x8] sm:$0xff] %vm1109, %v1088
        %1112 = vst.msk [vmem:[#allocation2 + $0x10] sm:$0xff] %vm1109, %v1090
        %1113 = vst.msk [vmem:[#allocation2 + $0x18] sm:$0xff] %vm1109, %v1092
        %1114 = vst.msk [vmem:[#allocation2 + $0x20] sm:$0xff] %vm1109, %v1094
        %1115 = vst.msk [vmem:[#allocation2 + $0x28] sm:$0xff] %vm1109, %v1096
        %1116 = vst.msk [vmem:[#allocation2 + $0x30] sm:$0xff] %vm1109, %v1098
        %1117 = vst.msk [vmem:[#allocation2 + $0x38] sm:$0xff] %vm1109, %v1100
        %v1118 = vrot.slane %v1009, 6
        %v1119 = vrot.slane %v1012, 7
        %v1120 = vor.u32 %v1118, %v1119
        %v1121 = vrot.slane %v1120, 4
        %v1122 = vrot.slane %v1018, 6
        %v1123 = vrot.slane %v1021, 7
        %v1124 = vor.u32 %v1122, %v1123
        %v1125 = vsel %vm687, %v1121, %v1124
        %v1126 = vrot.slane %v1124, 4
        %v1127 = vrot.slane %v1028, 6
        %v1128 = vrot.slane %v1031, 7
        %v1129 = vor.u32 %v1127, %v1128
        %v1130 = vsel %vm687, %v1126, %v1129
        %v1131 = vunpack.c.l.b16 %v1125
        %v1132 = vunpack.c.l.b16 %v1130
        %v1133 = vpack.c.b16 %v1132, %v1131
        %1134 = vrot.lane.b32.xlu0 %v810, 32
        %v1135 = vpop.permute.xlu0 %1134
        %1136 = vrot.lane.b32.xlu0 %v811, 32
        %v1137 = vpop.permute.xlu0 %1136
        %1138 = vrot.lane.b32.xlu0 %v812, 32
        %v1139 = vpop.permute.xlu0 %1138
        %1140 = vrot.lane.b32.xlu0 %v813, 32
        %v1141 = vpop.permute.xlu0 %1140
        %1142 = vrot.lane.b32.xlu0 %v814, 32
        %v1143 = vpop.permute.xlu0 %1142
        %1144 = vrot.lane.b32.xlu0 %v815, 32
        %v1145 = vpop.permute.xlu0 %1144
        %1146 = vrot.lane.b32.xlu0 %v974, 32
        %v1147 = vpop.permute.xlu0 %1146
        %1148 = vrot.lane.b32.xlu0 %v1133, 32
        %v1149 = vpop.permute.xlu0 %1148
        %vm1158 = vcmask 294144
        %1159 = vst.msk [vmem:[#allocation2] sm:$0xff] %vm1158, %v1135
        %1160 = vst.msk [vmem:[#allocation2 + $0x8] sm:$0xff] %vm1158, %v1137
        %1161 = vst.msk [vmem:[#allocation2 + $0x10] sm:$0xff] %vm1158, %v1139
        %1162 = vst.msk [vmem:[#allocation2 + $0x18] sm:$0xff] %vm1158, %v1141
        %1163 = vst.msk [vmem:[#allocation2 + $0x20] sm:$0xff] %vm1158, %v1143
        %1164 = vst.msk [vmem:[#allocation2 + $0x28] sm:$0xff] %vm1158, %v1145
        %1165 = vst.msk [vmem:[#allocation2 + $0x30] sm:$0xff] %vm1158, %v1147
        %1166 = vst.msk [vmem:[#allocation2 + $0x38] sm:$0xff] %vm1158, %v1149
        %vm1170 = vcmask 1042432
        %vm1171 = vcmask 1046532
        %vm1172 = vmor %vm1170, %vm1171
        %v1173 = vrot.slane %v235, 5
        %v1174 = vrot.slane %v1173, 4
        %v1175 = vrot.slane %v236, 5
        %v1176 = vsel %vm1172, %v1174, %v1175
        %v1177 = vrot.slane %v1175, 4
        %v1178 = vrot.slane %v237, 5
        %v1179 = vsel %vm1172, %v1177, %v1178
        %v1180 = vrot.slane %v238, 5
        %v1181 = vrot.slane %v1180, 4
        %v1182 = vrot.slane %v239, 5
        %v1183 = vsel %vm1172, %v1181, %v1182
        %v1184 = vrot.slane %v1182, 4
        %v1185 = vrot.slane %v240, 5
        %v1186 = vsel %vm1172, %v1184, %v1185
        %v1187 = vrot.slane %v241, 5
        %v1188 = vrot.slane %v1187, 4
        %v1189 = vrot.slane %v242, 5
        %v1190 = vsel %vm1172, %v1188, %v1189
        %v1191 = vrot.slane %v1189, 4
        %v1192 = vrot.slane %v243, 5
        %v1193 = vsel %vm1172, %v1191, %v1192
        %v1194 = vrot.slane %v244, 5
        %v1195 = vrot.slane %v1194, 4
        %v1196 = vrot.slane %v245, 5
        %v1197 = vsel %vm1172, %v1195, %v1196
        %v1198 = vrot.slane %v1196, 4
        %v1199 = vrot.slane %v246, 5
        %v1200 = vsel %vm1172, %v1198, %v1199
        %v1201 = vrot.slane %v247, 5
        %v1202 = vrot.slane %v1201, 4
        %v1203 = vrot.slane %v248, 5
        %v1204 = vsel %vm1172, %v1202, %v1203
        %v1205 = vrot.slane %v1203, 4
        %v1206 = vrot.slane %v249, 5
        %v1207 = vsel %vm1172, %v1205, %v1206
        %v1208 = vrot.slane %v250, 5
        %v1209 = vrot.slane %v1208, 4
        %v1210 = vrot.slane %v251, 5
        %v1211 = vsel %vm1172, %v1209, %v1210
        %v1212 = vrot.slane %v1210, 4
        %v1213 = vrot.slane %v252, 5
        %v1214 = vsel %vm1172, %v1212, %v1213
        %v1215 = vrot.slane %v253, 5
        %v1216 = vrot.slane %v1215, 4
        %v1217 = vrot.slane %v254, 5
        %v1218 = vsel %vm1172, %v1216, %v1217
        %v1219 = vrot.slane %v1217, 4
        %v1220 = vrot.slane %v255, 5
        %v1221 = vsel %vm1172, %v1219, %v1220
        %v1222 = vrot.slane %v256, 5
        %v1223 = vrot.slane %v1222, 4
        %v1224 = vrot.slane %v257, 5
        %v1225 = vsel %vm1172, %v1223, %v1224
        %v1226 = vrot.slane %v1224, 4
        %v1227 = vrot.slane %v258, 5
        %v1228 = vsel %vm1172, %v1226, %v1227
        %v1229 = vunpack.c.l.b16 %v1176
        %v1230 = vunpack.c.l.b16 %v1179
        %v1231 = vunpack.c.l.b16 %v1183
        %v1232 = vunpack.c.l.b16 %v1186
        %v1233 = vunpack.c.l.b16 %v1190
        %v1234 = vunpack.c.l.b16 %v1193
        %v1235 = vunpack.c.l.b16 %v1197
        %v1236 = vunpack.c.l.b16 %v1200
        %v1237 = vunpack.c.l.b16 %v1204
        %v1238 = vunpack.c.l.b16 %v1207
        %v1239 = vunpack.c.l.b16 %v1211
        %v1240 = vunpack.c.l.b16 %v1214
        %v1241 = vunpack.c.l.b16 %v1218
        %v1242 = vunpack.c.l.b16 %v1221
        %v1243 = vunpack.c.l.b16 %v1225
        %v1244 = vunpack.c.l.b16 %v1228
        %v1245 = vpack.c.b16 %v1230, %v1229
        %v1246 = vpack.c.b16 %v1232, %v1231
        %v1247 = vpack.c.b16 %v1234, %v1233
        %v1248 = vpack.c.b16 %v1236, %v1235
        %v1249 = vpack.c.b16 %v1238, %v1237
        %v1250 = vpack.c.b16 %v1240, %v1239
        %v1251 = vpack.c.b16 %v1242, %v1241
        %v1252 = vpack.c.b16 %v1244, %v1243
        %1253 = vrot.lane.b32.xlu0 %v1245, 36
        %v1254 = vpop.permute.xlu0 %1253
        %1255 = vrot.lane.b32.xlu0 %v1246, 36
        %v1256 = vpop.permute.xlu0 %1255
        %1257 = vrot.lane.b32.xlu0 %v1247, 36
        %v1258 = vpop.permute.xlu0 %1257
        %1259 = vrot.lane.b32.xlu0 %v1248, 36
        %v1260 = vpop.permute.xlu0 %1259
        %1261 = vrot.lane.b32.xlu0 %v1249, 36
        %v1262 = vpop.permute.xlu0 %1261
        %1263 = vrot.lane.b32.xlu0 %v1250, 36
        %v1264 = vpop.permute.xlu0 %1263
        %1265 = vrot.lane.b32.xlu0 %v1251, 36
        %v1266 = vpop.permute.xlu0 %1265
        %1267 = vrot.lane.b32.xlu0 %v1252, 36
        %v1268 = vpop.permute.xlu0 %1267
        %vm1277 = vcmask 326944
        %1278 = vst.msk [vmem:[#allocation2] sm:$0xff] %vm1277, %v1254
        %1279 = vst.msk [vmem:[#allocation2 + $0x8] sm:$0xff] %vm1277, %v1256
        %1280 = vst.msk [vmem:[#allocation2 + $0x10] sm:$0xff] %vm1277, %v1258
        %1281 = vst.msk [vmem:[#allocation2 + $0x18] sm:$0xff] %vm1277, %v1260
        %1282 = vst.msk [vmem:[#allocation2 + $0x20] sm:$0xff] %vm1277, %v1262
        %1283 = vst.msk [vmem:[#allocation2 + $0x28] sm:$0xff] %vm1277, %v1264
        %1284 = vst.msk [vmem:[#allocation2 + $0x30] sm:$0xff] %vm1277, %v1266
        %1285 = vst.msk [vmem:[#allocation2 + $0x38] sm:$0xff] %vm1277, %v1268
        %v1286 = vrot.slane %v235, 6
        %v1287 = vrot.slane %v1286, 4
        %v1288 = vrot.slane %v236, 6
        %v1289 = vsel %vm571, %v1287, %v1288
        %v1290 = vrot.slane %v1288, 4
        %v1291 = vrot.slane %v237, 6
        %v1292 = vsel %vm571, %v1290, %v1291
        %v1293 = vunpack.c.l.b16 %v1289
        %v1294 = vunpack.c.l.b16 %v1292
        %v1295 = vpack.c.b16 %v1294, %v1293
        %1296 = vrot.lane.b32.xlu0 %v1295, 40
        %v1297 = vpop.permute.xlu0 %1296
        %1298 = vrot.lane.b32.xlu0 %v644, 40
        %v1299 = vpop.permute.xlu0 %1298
        %1300 = vrot.lane.b32.xlu0 %v645, 40
        %v1301 = vpop.permute.xlu0 %1300
        %1302 = vrot.lane.b32.xlu0 %v646, 40
        %v1303 = vpop.permute.xlu0 %1302
        %1304 = vrot.lane.b32.xlu0 %v647, 40
        %v1305 = vpop.permute.xlu0 %1304
        %1306 = vrot.lane.b32.xlu0 %v648, 40
        %v1307 = vpop.permute.xlu0 %1306
        %1308 = vrot.lane.b32.xlu0 %v649, 40
        %v1309 = vpop.permute.xlu0 %1308
        %1310 = vrot.lane.b32.xlu0 %v650, 40
        %v1311 = vpop.permute.xlu0 %1310
        %vm1320 = vcmask 359744
        %1321 = vst.msk [vmem:[#allocation2] sm:$0xff] %vm1320, %v1297
        %1322 = vst.msk [vmem:[#allocation2 + $0x8] sm:$0xff] %vm1320, %v1299
        %1323 = vst.msk [vmem:[#allocation2 + $0x10] sm:$0xff] %vm1320, %v1301
        %1324 = vst.msk [vmem:[#allocation2 + $0x18] sm:$0xff] %vm1320, %v1303
        %1325 = vst.msk [vmem:[#allocation2 + $0x20] sm:$0xff] %vm1320, %v1305
        %1326 = vst.msk [vmem:[#allocation2 + $0x28] sm:$0xff] %vm1320, %v1307
        %1327 = vst.msk [vmem:[#allocation2 + $0x30] sm:$0xff] %vm1320, %v1309
        %1328 = vst.msk [vmem:[#allocation2 + $0x38] sm:$0xff] %vm1320, %v1311
        %vm1329 = vcmask 1040384
        %vm1330 = vcmask 1044484
        %vm1331 = vmor %vm1329, %vm1330
        %v1332 = vrot.slane %v235, 7
        %v1333 = vrot.slane %v1332, 4
        %v1334 = vrot.slane %v236, 7
        %v1335 = vsel %vm1331, %v1333, %v1334
        %v1336 = vrot.slane %v1334, 4
        %v1337 = vrot.slane %v237, 7
        %v1338 = vsel %vm1331, %v1336, %v1337
        %v1339 = vrot.slane %v238, 7
        %v1340 = vrot.slane %v1339, 4
        %v1341 = vrot.slane %v239, 7
        %v1342 = vsel %vm1331, %v1340, %v1341
        %v1343 = vrot.slane %v1341, 4
        %v1344 = vrot.slane %v240, 7
        %v1345 = vsel %vm1331, %v1343, %v1344
        %v1346 = vrot.slane %v241, 7
        %v1347 = vrot.slane %v1346, 4
        %v1348 = vrot.slane %v242, 7
        %v1349 = vsel %vm1331, %v1347, %v1348
        %v1350 = vrot.slane %v1348, 4
        %v1351 = vrot.slane %v243, 7
        %v1352 = vsel %vm1331, %v1350, %v1351
        %v1353 = vrot.slane %v244, 7
        %v1354 = vrot.slane %v1353, 4
        %v1355 = vrot.slane %v245, 7
        %v1356 = vsel %vm1331, %v1354, %v1355
        %v1357 = vrot.slane %v1355, 4
        %v1358 = vrot.slane %v246, 7
        %v1359 = vsel %vm1331, %v1357, %v1358
        %v1360 = vrot.slane %v247, 7
        %v1361 = vrot.slane %v1360, 4
        %v1362 = vrot.slane %v248, 7
        %v1363 = vsel %vm1331, %v1361, %v1362
        %v1364 = vrot.slane %v1362, 4
        %v1365 = vrot.slane %v249, 7
        %v1366 = vsel %vm1331, %v1364, %v1365
        %v1367 = vrot.slane %v250, 7
        %v1368 = vrot.slane %v1367, 4
        %v1369 = vrot.slane %v251, 7
        %v1370 = vsel %vm1331, %v1368, %v1369
        %v1371 = vrot.slane %v1369, 4
        %v1372 = vrot.slane %v252, 7
        %v1373 = vsel %vm1331, %v1371, %v1372
        %v1374 = vrot.slane %v253, 7
        %v1375 = vrot.slane %v1374, 4
        %v1376 = vrot.slane %v254, 7
        %v1377 = vsel %vm1331, %v1375, %v1376
        %v1378 = vrot.slane %v1376, 4
        %v1379 = vrot.slane %v255, 7
        %v1380 = vsel %vm1331, %v1378, %v1379
        %v1381 = vrot.slane %v256, 7
        %v1382 = vrot.slane %v1381, 4
        %v1383 = vrot.slane %v257, 7
        %v1384 = vsel %vm1331, %v1382, %v1383
        %v1385 = vrot.slane %v1383, 4
        %v1386 = vrot.slane %v258, 7
        %v1387 = vsel %vm1331, %v1385, %v1386
        %v1388 = vunpack.c.l.b16 %v1335
        %v1389 = vunpack.c.l.b16 %v1338
        %v1390 = vunpack.c.l.b16 %v1342
        %v1391 = vunpack.c.l.b16 %v1345
        %v1392 = vunpack.c.l.b16 %v1349
        %v1393 = vunpack.c.l.b16 %v1352
        %v1394 = vunpack.c.l.b16 %v1356
        %v1395 = vunpack.c.l.b16 %v1359
        %v1396 = vunpack.c.l.b16 %v1363
        %v1397 = vunpack.c.l.b16 %v1366
        %v1398 = vunpack.c.l.b16 %v1370
        %v1399 = vunpack.c.l.b16 %v1373
        %v1400 = vunpack.c.l.b16 %v1377
        %v1401 = vunpack.c.l.b16 %v1380
        %v1402 = vunpack.c.l.b16 %v1384
        %v1403 = vunpack.c.l.b16 %v1387
        %v1404 = vpack.c.b16 %v1389, %v1388
        %v1405 = vpack.c.b16 %v1391, %v1390
        %v1406 = vpack.c.b16 %v1393, %v1392
        %v1407 = vpack.c.b16 %v1395, %v1394
        %v1408 = vpack.c.b16 %v1397, %v1396
        %v1409 = vpack.c.b16 %v1399, %v1398
        %v1410 = vpack.c.b16 %v1401, %v1400
        %v1411 = vpack.c.b16 %v1403, %v1402
        %1412 = vrot.lane.b32.xlu0 %v1404, 44
        %v1413 = vpop.permute.xlu0 %1412
        %1414 = vrot.lane.b32.xlu0 %v1405, 44
        %v1415 = vpop.permute.xlu0 %1414
        %1416 = vrot.lane.b32.xlu0 %v1406, 44
        %v1417 = vpop.permute.xlu0 %1416
        %1418 = vrot.lane.b32.xlu0 %v1407, 44
        %v1419 = vpop.permute.xlu0 %1418
        %1420 = vrot.lane.b32.xlu0 %v1408, 44
        %v1421 = vpop.permute.xlu0 %1420
        %1422 = vrot.lane.b32.xlu0 %v1409, 44
        %v1423 = vpop.permute.xlu0 %1422
        %1424 = vrot.lane.b32.xlu0 %v1410, 44
        %v1425 = vpop.permute.xlu0 %1424
        %1426 = vrot.lane.b32.xlu0 %v1411, 44
        %v1427 = vpop.permute.xlu0 %1426
        %vm1436 = vcmask 392544
        %1437 = vst.msk [vmem:[#allocation2] sm:$0xff] %vm1436, %v1413
        %1438 = vst.msk [vmem:[#allocation2 + $0x8] sm:$0xff] %vm1436, %v1415
        %1439 = vst.msk [vmem:[#allocation2 + $0x10] sm:$0xff] %vm1436, %v1417
        %1440 = vst.msk [vmem:[#allocation2 + $0x18] sm:$0xff] %vm1436, %v1419
        %1441 = vst.msk [vmem:[#allocation2 + $0x20] sm:$0xff] %vm1436, %v1421
        %1442 = vst.msk [vmem:[#allocation2 + $0x28] sm:$0xff] %vm1436, %v1423
        %1443 = vst.msk [vmem:[#allocation2 + $0x30] sm:$0xff] %vm1436, %v1425
        %1444 = vst.msk [vmem:[#allocation2 + $0x38] sm:$0xff] %vm1436, %v1427
        %v1445 = vrot.slane %v259, 5
        %v1446 = vrot.slane %v1445, 4
        %v1447 = vrot.slane %v260, 5
        %v1448 = vsel %vm1172, %v1446, %v1447
        %v1449 = vrot.slane %v1447, 4
        %v1450 = vrot.slane %v261, 5
        %v1451 = vsel %vm1172, %v1449, %v1450
        %v1452 = vrot.slane %v262, 5
        %v1453 = vrot.slane %v1452, 4
        %v1454 = vrot.slane %v263, 5
        %v1455 = vsel %vm1172, %v1453, %v1454
        %v1456 = vrot.slane %v1454, 4
        %v1457 = vrot.slane %v264, 5
        %v1458 = vsel %vm1172, %v1456, %v1457
        %v1459 = vunpack.c.l.b16 %v1448
        %v1460 = vunpack.c.l.b16 %v1451
        %v1461 = vunpack.c.l.b16 %v1455
        %v1462 = vunpack.c.l.b16 %v1458
        %v1463 = vpack.c.b16 %v1460, %v1459
        %v1464 = vpack.c.b16 %v1462, %v1461
        %1465 = vrot.lane.b32.xlu0 %v1247, 48
        %v1466 = vpop.permute.xlu0 %1465
        %1467 = vrot.lane.b32.xlu0 %v1248, 48
        %v1468 = vpop.permute.xlu0 %1467
        %1469 = vrot.lane.b32.xlu0 %v1249, 48
        %v1470 = vpop.permute.xlu0 %1469
        %1471 = vrot.lane.b32.xlu0 %v1250, 48
        %v1472 = vpop.permute.xlu0 %1471
        %1473 = vrot.lane.b32.xlu0 %v1251, 48
        %v1474 = vpop.permute.xlu0 %1473
        %1475 = vrot.lane.b32.xlu0 %v1252, 48
        %v1476 = vpop.permute.xlu0 %1475
        %1477 = vrot.lane.b32.xlu0 %v1463, 48
        %v1478 = vpop.permute.xlu0 %1477
        %1479 = vrot.lane.b32.xlu0 %v1464, 48
        %v1480 = vpop.permute.xlu0 %1479
        %vm1489 = vcmask 425344
        %1490 = vst.msk [vmem:[#allocation2] sm:$0xff] %vm1489, %v1466
        %1491 = vst.msk [vmem:[#allocation2 + $0x8] sm:$0xff] %vm1489, %v1468
        %1492 = vst.msk [vmem:[#allocation2 + $0x10] sm:$0xff] %vm1489, %v1470
        %1493 = vst.msk [vmem:[#allocation2 + $0x18] sm:$0xff] %vm1489, %v1472
        %1494 = vst.msk [vmem:[#allocation2 + $0x20] sm:$0xff] %vm1489, %v1474
        %1495 = vst.msk [vmem:[#allocation2 + $0x28] sm:$0xff] %vm1489, %v1476
        %1496 = vst.msk [vmem:[#allocation2 + $0x30] sm:$0xff] %vm1489, %v1478
        %1497 = vst.msk [vmem:[#allocation2 + $0x38] sm:$0xff] %vm1489, %v1480
        %1498 = vrot.lane.b32.xlu0 %v645, 52
        %v1499 = vpop.permute.xlu0 %1498
        %1500 = vrot.lane.b32.xlu0 %v646, 52
        %v1501 = vpop.permute.xlu0 %1500
        %1502 = vrot.lane.b32.xlu0 %v647, 52
        %v1503 = vpop.permute.xlu0 %1502
        %1504 = vrot.lane.b32.xlu0 %v648, 52
        %v1505 = vpop.permute.xlu0 %1504
        %1506 = vrot.lane.b32.xlu0 %v649, 52
        %v1507 = vpop.permute.xlu0 %1506
        %1508 = vrot.lane.b32.xlu0 %v650, 52
        %v1509 = vpop.permute.xlu0 %1508
        %1510 = vrot.lane.b32.xlu0 %v651, 52
        %v1511 = vpop.permute.xlu0 %1510
        %1512 = vrot.lane.b32.xlu0 %v925, 52
        %v1513 = vpop.permute.xlu0 %1512
        %vm1522 = vcmask 458144
        %1523 = vst.msk [vmem:[#allocation2] sm:$0xff] %vm1522, %v1499
        %1524 = vst.msk [vmem:[#allocation2 + $0x8] sm:$0xff] %vm1522, %v1501
        %1525 = vst.msk [vmem:[#allocation2 + $0x10] sm:$0xff] %vm1522, %v1503
        %1526 = vst.msk [vmem:[#allocation2 + $0x18] sm:$0xff] %vm1522, %v1505
        %1527 = vst.msk [vmem:[#allocation2 + $0x20] sm:$0xff] %vm1522, %v1507
        %1528 = vst.msk [vmem:[#allocation2 + $0x28] sm:$0xff] %vm1522, %v1509
        %1529 = vst.msk [vmem:[#allocation2 + $0x30] sm:$0xff] %vm1522, %v1511
        %1530 = vst.msk [vmem:[#allocation2 + $0x38] sm:$0xff] %vm1522, %v1513
        %v1531 = vrot.slane %v259, 7
        %v1532 = vrot.slane %v1531, 4
        %v1533 = vrot.slane %v260, 7
        %v1534 = vsel %vm1331, %v1532, %v1533
        %v1535 = vrot.slane %v1533, 4
        %v1536 = vrot.slane %v261, 7
        %v1537 = vsel %vm1331, %v1535, %v1536
        %v1538 = vrot.slane %v262, 7
        %v1539 = vrot.slane %v1538, 4
        %v1540 = vrot.slane %v263, 7
        %v1541 = vsel %vm1331, %v1539, %v1540
        %v1542 = vrot.slane %v1540, 4
        %v1543 = vrot.slane %v264, 7
        %v1544 = vsel %vm1331, %v1542, %v1543
        %v1545 = vunpack.c.l.b16 %v1534
        %v1546 = vunpack.c.l.b16 %v1537
        %v1547 = vunpack.c.l.b16 %v1541
        %v1548 = vunpack.c.l.b16 %v1544
        %v1549 = vpack.c.b16 %v1546, %v1545
        %v1550 = vpack.c.b16 %v1548, %v1547
        %1551 = vrot.lane.b32.xlu0 %v1406, 56
        %v1552 = vpop.permute.xlu0 %1551
        %1553 = vrot.lane.b32.xlu0 %v1407, 56
        %v1554 = vpop.permute.xlu0 %1553
        %1555 = vrot.lane.b32.xlu0 %v1408, 56
        %v1556 = vpop.permute.xlu0 %1555
        %1557 = vrot.lane.b32.xlu0 %v1409, 56
        %v1558 = vpop.permute.xlu0 %1557
        %1559 = vrot.lane.b32.xlu0 %v1410, 56
        %v1560 = vpop.permute.xlu0 %1559
        %1561 = vrot.lane.b32.xlu0 %v1411, 56
        %v1562 = vpop.permute.xlu0 %1561
        %1563 = vrot.lane.b32.xlu0 %v1549, 56
        %v1564 = vpop.permute.xlu0 %1563
        %1565 = vrot.lane.b32.xlu0 %v1550, 56
        %v1566 = vpop.permute.xlu0 %1565
        %vm1575 = vcmask 490944
        %1576 = vst.msk [vmem:[#allocation2] sm:$0xff] %vm1575, %v1552
        %1577 = vst.msk [vmem:[#allocation2 + $0x8] sm:$0xff] %vm1575, %v1554
        %1578 = vst.msk [vmem:[#allocation2 + $0x10] sm:$0xff] %vm1575, %v1556
        %1579 = vst.msk [vmem:[#allocation2 + $0x18] sm:$0xff] %vm1575, %v1558
        %1580 = vst.msk [vmem:[#allocation2 + $0x20] sm:$0xff] %vm1575, %v1560
        %1581 = vst.msk [vmem:[#allocation2 + $0x28] sm:$0xff] %vm1575, %v1562
        %1582 = vst.msk [vmem:[#allocation2 + $0x30] sm:$0xff] %vm1575, %v1564
        %1583 = vst.msk [vmem:[#allocation2 + $0x38] sm:$0xff] %vm1575, %v1566
        %v1587 = vrot.slane %v265, 5
        %v1588 = vrot.slane %v1587, 4
        %v1589 = vrot.slane %v266, 5
        %v1590 = vsel %vm1172, %v1588, %v1589
        %v1591 = vrot.slane %v1589, 4
        %v1592 = vrot.slane %v267, 5
        %v1593 = vsel %vm1172, %v1591, %v1592
        %v1594 = vrot.slane %v268, 5
        %v1595 = vrot.slane %v1594, 4
        %v1596 = vrot.slane %v269, 5
        %v1597 = vsel %vm1172, %v1595, %v1596
        %v1598 = vrot.slane %v1596, 4
        %v1599 = vrot.slane %v270, 5
        %v1600 = vsel %vm1172, %v1598, %v1599
        %v1601 = vunpack.c.l.b16 %v1590
        %v1602 = vunpack.c.l.b16 %v1593
        %v1603 = vunpack.c.l.b16 %v1597
        %v1604 = vunpack.c.l.b16 %v1600
        %v1605 = vpack.c.b16 %v1602, %v1601
        %v1606 = vpack.c.b16 %v1604, %v1603
        %1607 = vrot.lane.b32.xlu0 %v1249, 60
        %v1608 = vpop.permute.xlu0 %1607
        %1609 = vrot.lane.b32.xlu0 %v1250, 60
        %v1610 = vpop.permute.xlu0 %1609
        %1611 = vrot.lane.b32.xlu0 %v1251, 60
        %v1612 = vpop.permute.xlu0 %1611
        %1613 = vrot.lane.b32.xlu0 %v1252, 60
        %v1614 = vpop.permute.xlu0 %1613
        %1615 = vrot.lane.b32.xlu0 %v1463, 60
        %v1616 = vpop.permute.xlu0 %1615
        %1617 = vrot.lane.b32.xlu0 %v1464, 60
        %v1618 = vpop.permute.xlu0 %1617
        %1619 = vrot.lane.b32.xlu0 %v1605, 60
        %v1620 = vpop.permute.xlu0 %1619
        %1621 = vrot.lane.b32.xlu0 %v1606, 60
        %v1622 = vpop.permute.xlu0 %1621
        %vm1631 = vcmask 523744
        %1632 = vst.msk [vmem:[#allocation2] sm:$0xff] %vm1631, %v1608
        %1633 = vst.msk [vmem:[#allocation2 + $0x8] sm:$0xff] %vm1631, %v1610
        %1634 = vst.msk [vmem:[#allocation2 + $0x10] sm:$0xff] %vm1631, %v1612
        %1635 = vst.msk [vmem:[#allocation2 + $0x18] sm:$0xff] %vm1631, %v1614
        %1636 = vst.msk [vmem:[#allocation2 + $0x20] sm:$0xff] %vm1631, %v1616
        %1637 = vst.msk [vmem:[#allocation2 + $0x28] sm:$0xff] %vm1631, %v1618
        %1638 = vst.msk [vmem:[#allocation2 + $0x30] sm:$0xff] %vm1631, %v1620
        %1639 = vst.msk [vmem:[#allocation2 + $0x38] sm:$0xff] %vm1631, %v1622
        %v1640 = vrot.slane %v268, 6
        %v1641 = vrot.slane %v1640, 4
        %v1642 = vrot.slane %v269, 6
        %v1643 = vsel %vm571, %v1641, %v1642
        %v1644 = vrot.slane %v1642, 4
        %v1645 = vrot.slane %v270, 6
        %v1646 = vsel %vm571, %v1644, %v1645
        %v1647 = vunpack.c.l.b16 %v1643
        %v1648 = vunpack.c.l.b16 %v1646
        %v1649 = vpack.c.b16 %v1648, %v1647
        %1650 = vrot.lane.b32.xlu0 %v647, 64
        %v1651 = vpop.permute.xlu0 %1650
        %1652 = vrot.lane.b32.xlu0 %v648, 64
        %v1653 = vpop.permute.xlu0 %1652
        %1654 = vrot.lane.b32.xlu0 %v649, 64
        %v1655 = vpop.permute.xlu0 %1654
        %1656 = vrot.lane.b32.xlu0 %v650, 64
        %v1657 = vpop.permute.xlu0 %1656
        %1658 = vrot.lane.b32.xlu0 %v651, 64
        %v1659 = vpop.permute.xlu0 %1658
        %1660 = vrot.lane.b32.xlu0 %v925, 64
        %v1661 = vpop.permute.xlu0 %1660
        %1662 = vrot.lane.b32.xlu0 %v1084, 64
        %v1663 = vpop.permute.xlu0 %1662
        %1664 = vrot.lane.b32.xlu0 %v1649, 64
        %v1665 = vpop.permute.xlu0 %1664
        %vm1674 = vcmask 556544
        %1675 = vst.msk [vmem:[#allocation2] sm:$0xff] %vm1674, %v1651
        %1676 = vst.msk [vmem:[#allocation2 + $0x8] sm:$0xff] %vm1674, %v1653
        %1677 = vst.msk [vmem:[#allocation2 + $0x10] sm:$0xff] %vm1674, %v1655
        %1678 = vst.msk [vmem:[#allocation2 + $0x18] sm:$0xff] %vm1674, %v1657
        %1679 = vst.msk [vmem:[#allocation2 + $0x20] sm:$0xff] %vm1674, %v1659
        %1680 = vst.msk [vmem:[#allocation2 + $0x28] sm:$0xff] %vm1674, %v1661
        %1681 = vst.msk [vmem:[#allocation2 + $0x30] sm:$0xff] %vm1674, %v1663
        %1682 = vst.msk [vmem:[#allocation2 + $0x38] sm:$0xff] %vm1674, %v1665
        %v1683 = vrot.slane %v265, 7
        %v1684 = vrot.slane %v1683, 4
        %v1685 = vrot.slane %v266, 7
        %v1686 = vsel %vm1331, %v1684, %v1685
        %v1687 = vrot.slane %v1685, 4
        %v1688 = vrot.slane %v267, 7
        %v1689 = vsel %vm1331, %v1687, %v1688
        %v1690 = vrot.slane %v268, 7
        %v1691 = vrot.slane %v1690, 4
        %v1692 = vrot.slane %v269, 7
        %v1693 = vsel %vm1331, %v1691, %v1692
        %v1694 = vrot.slane %v1692, 4
        %v1695 = vrot.slane %v270, 7
        %v1696 = vsel %vm1331, %v1694, %v1695
        %v1697 = vunpack.c.l.b16 %v1686
        %v1698 = vunpack.c.l.b16 %v1689
        %v1699 = vunpack.c.l.b16 %v1693
        %v1700 = vunpack.c.l.b16 %v1696
        %v1701 = vpack.c.b16 %v1698, %v1697
        %v1702 = vpack.c.b16 %v1700, %v1699
        %1703 = vrot.lane.b32.xlu0 %v1408, 68
        %v1704 = vpop.permute.xlu0 %1703
        %1705 = vrot.lane.b32.xlu0 %v1409, 68
        %v1706 = vpop.permute.xlu0 %1705
        %1707 = vrot.lane.b32.xlu0 %v1410, 68
        %v1708 = vpop.permute.xlu0 %1707
        %1709 = vrot.lane.b32.xlu0 %v1411, 68
        %v1710 = vpop.permute.xlu0 %1709
        %1711 = vrot.lane.b32.xlu0 %v1549, 68
        %v1712 = vpop.permute.xlu0 %1711
        %1713 = vrot.lane.b32.xlu0 %v1550, 68
        %v1714 = vpop.permute.xlu0 %1713
        %1715 = vrot.lane.b32.xlu0 %v1701, 68
        %v1716 = vpop.permute.xlu0 %1715
        %1717 = vrot.lane.b32.xlu0 %v1702, 68
        %v1718 = vpop.permute.xlu0 %1717
        %vm1727 = vcmask 589344
        %1728 = vst.msk [vmem:[#allocation2] sm:$0xff] %vm1727, %v1704
        %1729 = vst.msk [vmem:[#allocation2 + $0x8] sm:$0xff] %vm1727, %v1706
        %1730 = vst.msk [vmem:[#allocation2 + $0x10] sm:$0xff] %vm1727, %v1708
        %1731 = vst.msk [vmem:[#allocation2 + $0x18] sm:$0xff] %vm1727, %v1710
        %1732 = vst.msk [vmem:[#allocation2 + $0x20] sm:$0xff] %vm1727, %v1712
        %1733 = vst.msk [vmem:[#allocation2 + $0x28] sm:$0xff] %vm1727, %v1714
        %1734 = vst.msk [vmem:[#allocation2 + $0x30] sm:$0xff] %vm1727, %v1716
        %1735 = vst.msk [vmem:[#allocation2 + $0x38] sm:$0xff] %vm1727, %v1718
        %v1740 = vunpack.c.l.b16 %v229
        %v1741 = vunpack.c.l.b16 %v230
        %v1742 = vunpack.c.l.b16 %v232
        %v1743 = vunpack.c.l.b16 %v233
        %v1744 = vunpack.c.l.b16 %v235
        %v1745 = vunpack.c.l.b16 %v236
        %v1746 = vunpack.c.l.b16 %v238
        %v1747 = vunpack.c.l.b16 %v239
        %v1748 = vunpack.c.l.b16 %v241
        %v1749 = vunpack.c.l.b16 %v242
        %v1750 = vunpack.c.l.b16 %v244
        %v1751 = vunpack.c.l.b16 %v245
        %v1752 = vunpack.c.l.b16 %v247
        %v1753 = vunpack.c.l.b16 %v248
        %v1754 = vunpack.c.l.b16 %v250
        %v1755 = vunpack.c.l.b16 %v251
        %v1756 = vpack.c.b16 %v1741, %v1740
        %v1757 = vpack.c.b16 %v1743, %v1742
        %v1758 = vpack.c.b16 %v1745, %v1744
        %v1759 = vpack.c.b16 %v1747, %v1746
        %v1760 = vpack.c.b16 %v1749, %v1748
        %v1761 = vpack.c.b16 %v1751, %v1750
        %v1762 = vpack.c.b16 %v1753, %v1752
        %v1763 = vpack.c.b16 %v1755, %v1754
        %1764 = vrot.lane.b32.xlu0 %v1756, 72
        %v1765 = vpop.permute.xlu0 %1764
        %1766 = vrot.lane.b32.xlu0 %v1757, 72
        %v1767 = vpop.permute.xlu0 %1766
        %1768 = vrot.lane.b32.xlu0 %v1758, 72
        %v1769 = vpop.permute.xlu0 %1768
        %1770 = vrot.lane.b32.xlu0 %v1759, 72
        %v1771 = vpop.permute.xlu0 %1770
        %1772 = vrot.lane.b32.xlu0 %v1760, 72
        %v1773 = vpop.permute.xlu0 %1772
        %1774 = vrot.lane.b32.xlu0 %v1761, 72
        %v1775 = vpop.permute.xlu0 %1774
        %1776 = vrot.lane.b32.xlu0 %v1762, 72
        %v1777 = vpop.permute.xlu0 %1776
        %1778 = vrot.lane.b32.xlu0 %v1763, 72
        %v1779 = vpop.permute.xlu0 %1778
        %vm1788 = vcmask 622144
        %1789 = vst.msk [vmem:[#allocation2] sm:$0xff] %vm1788, %v1765
        %1790 = vst.msk [vmem:[#allocation2 + $0x8] sm:$0xff] %vm1788, %v1767
        %1791 = vst.msk [vmem:[#allocation2 + $0x10] sm:$0xff] %vm1788, %v1769
        %1792 = vst.msk [vmem:[#allocation2 + $0x18] sm:$0xff] %vm1788, %v1771
        %1793 = vst.msk [vmem:[#allocation2 + $0x20] sm:$0xff] %vm1788, %v1773
        %1794 = vst.msk [vmem:[#allocation2 + $0x28] sm:$0xff] %vm1788, %v1775
        %1795 = vst.msk [vmem:[#allocation2 + $0x30] sm:$0xff] %vm1788, %v1777
        %1796 = vst.msk [vmem:[#allocation2 + $0x38] sm:$0xff] %vm1788, %v1779
        %v1799 = vrot.slane %v229, 6
        %v1800 = vrot.slane %v1799, 4
        %v1801 = vrot.slane %v230, 6
        %v1802 = vsel %vm571, %v1800, %v1801
        %v1803 = vrot.slane %v1801, 4
        %v1804 = vrot.slane %v231, 6
        %v1805 = vsel %vm571, %v1803, %v1804
        %v1806 = vrot.slane %v232, 6
        %v1807 = vrot.slane %v1806, 4
        %v1808 = vrot.slane %v233, 6
        %v1809 = vsel %vm571, %v1807, %v1808
        %v1810 = vrot.slane %v1808, 4
        %v1811 = vrot.slane %v234, 6
        %v1812 = vsel %vm571, %v1810, %v1811
        %v1813 = vunpack.c.l.b16 %v1802
        %v1814 = vunpack.c.l.b16 %v1805
        %v1815 = vunpack.c.l.b16 %v1809
        %v1816 = vunpack.c.l.b16 %v1812
        %v1817 = vpack.c.b16 %v1814, %v1813
        %v1818 = vpack.c.b16 %v1816, %v1815
        %1819 = vrot.lane.b32.xlu0 %v1817, 76
        %v1820 = vpop.permute.xlu0 %1819
        %1821 = vrot.lane.b32.xlu0 %v1818, 76
        %v1822 = vpop.permute.xlu0 %1821
        %1823 = vrot.lane.b32.xlu0 %v1295, 76
        %v1824 = vpop.permute.xlu0 %1823
        %1825 = vrot.lane.b32.xlu0 %v644, 76
        %v1826 = vpop.permute.xlu0 %1825
        %1827 = vrot.lane.b32.xlu0 %v645, 76
        %v1828 = vpop.permute.xlu0 %1827
        %1829 = vrot.lane.b32.xlu0 %v646, 76
        %v1830 = vpop.permute.xlu0 %1829
        %1831 = vrot.lane.b32.xlu0 %v647, 76
        %v1832 = vpop.permute.xlu0 %1831
        %1833 = vrot.lane.b32.xlu0 %v648, 76
        %v1834 = vpop.permute.xlu0 %1833
        %vm1843 = vcmask 654944
        %1844 = vst.msk [vmem:[#allocation2] sm:$0xff] %vm1843, %v1820
        %1845 = vst.msk [vmem:[#allocation2 + $0x8] sm:$0xff] %vm1843, %v1822
        %1846 = vst.msk [vmem:[#allocation2 + $0x10] sm:$0xff] %vm1843, %v1824
        %1847 = vst.msk [vmem:[#allocation2 + $0x18] sm:$0xff] %vm1843, %v1826
        %1848 = vst.msk [vmem:[#allocation2 + $0x20] sm:$0xff] %vm1843, %v1828
        %1849 = vst.msk [vmem:[#allocation2 + $0x28] sm:$0xff] %vm1843, %v1830
        %1850 = vst.msk [vmem:[#allocation2 + $0x30] sm:$0xff] %vm1843, %v1832
        %1851 = vst.msk [vmem:[#allocation2 + $0x38] sm:$0xff] %vm1843, %v1834
        %v1852 = vunpack.c.l.b16 %v231
        %v1853 = vunpack.c.l.b16 %v234
        %v1854 = vunpack.c.l.b16 %v237
        %v1855 = vunpack.c.l.b16 %v240
        %v1856 = vunpack.c.l.b16 %v243
        %v1857 = vunpack.c.l.b16 %v246
        %v1858 = vunpack.c.l.b16 %v249
        %v1859 = vunpack.c.l.b16 %v252
        %v1860 = vpack.c.b16 %v1852, %v1741
        %v1861 = vpack.c.b16 %v1853, %v1743
        %v1862 = vpack.c.b16 %v1854, %v1745
        %v1863 = vpack.c.b16 %v1855, %v1747
        %v1864 = vpack.c.b16 %v1856, %v1749
        %v1865 = vpack.c.b16 %v1857, %v1751
        %v1866 = vpack.c.b16 %v1858, %v1753
        %v1867 = vpack.c.b16 %v1859, %v1755
        %1868 = vrot.lane.b32.xlu0 %v1860, 80
        %v1869 = vpop.permute.xlu0 %1868
        %1870 = vrot.lane.b32.xlu0 %v1861, 80
        %v1871 = vpop.permute.xlu0 %1870
        %1872 = vrot.lane.b32.xlu0 %v1862, 80
        %v1873 = vpop.permute.xlu0 %1872
        %1874 = vrot.lane.b32.xlu0 %v1863, 80
        %v1875 = vpop.permute.xlu0 %1874
        %1876 = vrot.lane.b32.xlu0 %v1864, 80
        %v1877 = vpop.permute.xlu0 %1876
        %1878 = vrot.lane.b32.xlu0 %v1865, 80
        %v1879 = vpop.permute.xlu0 %1878
        %1880 = vrot.lane.b32.xlu0 %v1866, 80
        %v1881 = vpop.permute.xlu0 %1880
        %1882 = vrot.lane.b32.xlu0 %v1867, 80
        %v1883 = vpop.permute.xlu0 %1882
        %vm1892 = vcmask 687744
        %1893 = vst.msk [vmem:[#allocation2] sm:$0xff] %vm1892, %v1869
        %1894 = vst.msk [vmem:[#allocation2 + $0x8] sm:$0xff] %vm1892, %v1871
        %1895 = vst.msk [vmem:[#allocation2 + $0x10] sm:$0xff] %vm1892, %v1873
        %1896 = vst.msk [vmem:[#allocation2 + $0x18] sm:$0xff] %vm1892, %v1875
        %1897 = vst.msk [vmem:[#allocation2 + $0x20] sm:$0xff] %vm1892, %v1877
        %1898 = vst.msk [vmem:[#allocation2 + $0x28] sm:$0xff] %vm1892, %v1879
        %1899 = vst.msk [vmem:[#allocation2 + $0x30] sm:$0xff] %vm1892, %v1881
        %1900 = vst.msk [vmem:[#allocation2 + $0x38] sm:$0xff] %vm1892, %v1883
        %v1901 = vunpack.c.l.b16 %v253
        %v1902 = vunpack.c.l.b16 %v254
        %v1903 = vunpack.c.l.b16 %v256
        %v1904 = vunpack.c.l.b16 %v257
        %v1905 = vunpack.c.l.b16 %v259
        %v1906 = vunpack.c.l.b16 %v260
        %v1907 = vunpack.c.l.b16 %v262
        %v1908 = vunpack.c.l.b16 %v263
        %v1909 = vpack.c.b16 %v1902, %v1901
        %v1910 = vpack.c.b16 %v1904, %v1903
        %v1911 = vpack.c.b16 %v1906, %v1905
        %v1912 = vpack.c.b16 %v1908, %v1907
        %1913 = vrot.lane.b32.xlu0 %v1760, 84
        %v1914 = vpop.permute.xlu0 %1913
        %1915 = vrot.lane.b32.xlu0 %v1761, 84
        %v1916 = vpop.permute.xlu0 %1915
        %1917 = vrot.lane.b32.xlu0 %v1762, 84
        %v1918 = vpop.permute.xlu0 %1917
        %1919 = vrot.lane.b32.xlu0 %v1763, 84
        %v1920 = vpop.permute.xlu0 %1919
        %1921 = vrot.lane.b32.xlu0 %v1909, 84
        %v1922 = vpop.permute.xlu0 %1921
        %1923 = vrot.lane.b32.xlu0 %v1910, 84
        %v1924 = vpop.permute.xlu0 %1923
        %1925 = vrot.lane.b32.xlu0 %v1911, 84
        %v1926 = vpop.permute.xlu0 %1925
        %1927 = vrot.lane.b32.xlu0 %v1912, 84
        %v1928 = vpop.permute.xlu0 %1927
        %vm1937 = vcmask 720544
        %1938 = vst.msk [vmem:[#allocation2] sm:$0xff] %vm1937, %v1914
        %1939 = vst.msk [vmem:[#allocation2 + $0x8] sm:$0xff] %vm1937, %v1916
        %1940 = vst.msk [vmem:[#allocation2 + $0x10] sm:$0xff] %vm1937, %v1918
        %1941 = vst.msk [vmem:[#allocation2 + $0x18] sm:$0xff] %vm1937, %v1920
        %1942 = vst.msk [vmem:[#allocation2 + $0x20] sm:$0xff] %vm1937, %v1922
        %1943 = vst.msk [vmem:[#allocation2 + $0x28] sm:$0xff] %vm1937, %v1924
        %1944 = vst.msk [vmem:[#allocation2 + $0x30] sm:$0xff] %vm1937, %v1926
        %1945 = vst.msk [vmem:[#allocation2 + $0x38] sm:$0xff] %vm1937, %v1928
        %1946 = vrot.lane.b32.xlu0 %v645, 88
        %v1947 = vpop.permute.xlu0 %1946
        %1948 = vrot.lane.b32.xlu0 %v646, 88
        %v1949 = vpop.permute.xlu0 %1948
        %1950 = vrot.lane.b32.xlu0 %v647, 88
        %v1951 = vpop.permute.xlu0 %1950
        %1952 = vrot.lane.b32.xlu0 %v648, 88
        %v1953 = vpop.permute.xlu0 %1952
        %1954 = vrot.lane.b32.xlu0 %v649, 88
        %v1955 = vpop.permute.xlu0 %1954
        %1956 = vrot.lane.b32.xlu0 %v650, 88
        %v1957 = vpop.permute.xlu0 %1956
        %1958 = vrot.lane.b32.xlu0 %v651, 88
        %v1959 = vpop.permute.xlu0 %1958
        %1960 = vrot.lane.b32.xlu0 %v925, 88
        %v1961 = vpop.permute.xlu0 %1960
        %vm1970 = vcmask 753344
        %1971 = vst.msk [vmem:[#allocation2] sm:$0xff] %vm1970, %v1947
        %1972 = vst.msk [vmem:[#allocation2 + $0x8] sm:$0xff] %vm1970, %v1949
        %1973 = vst.msk [vmem:[#allocation2 + $0x10] sm:$0xff] %vm1970, %v1951
        %1974 = vst.msk [vmem:[#allocation2 + $0x18] sm:$0xff] %vm1970, %v1953
        %1975 = vst.msk [vmem:[#allocation2 + $0x20] sm:$0xff] %vm1970, %v1955
        %1976 = vst.msk [vmem:[#allocation2 + $0x28] sm:$0xff] %vm1970, %v1957
        %1977 = vst.msk [vmem:[#allocation2 + $0x30] sm:$0xff] %vm1970, %v1959
        %1978 = vst.msk [vmem:[#allocation2 + $0x38] sm:$0xff] %vm1970, %v1961
        %v1979 = vunpack.c.l.b16 %v255
        %v1980 = vunpack.c.l.b16 %v258
        %v1981 = vunpack.c.l.b16 %v261
        %v1982 = vunpack.c.l.b16 %v264
        %v1983 = vpack.c.b16 %v1979, %v1902
        %v1984 = vpack.c.b16 %v1980, %v1904
        %v1985 = vpack.c.b16 %v1981, %v1906
        %v1986 = vpack.c.b16 %v1982, %v1908
        %1987 = vrot.lane.b32.xlu0 %v1864, 92
        %v1988 = vpop.permute.xlu0 %1987
        %1989 = vrot.lane.b32.xlu0 %v1865, 92
        %v1990 = vpop.permute.xlu0 %1989
        %1991 = vrot.lane.b32.xlu0 %v1866, 92
        %v1992 = vpop.permute.xlu0 %1991
        %1993 = vrot.lane.b32.xlu0 %v1867, 92
        %v1994 = vpop.permute.xlu0 %1993
        %1995 = vrot.lane.b32.xlu0 %v1983, 92
        %v1996 = vpop.permute.xlu0 %1995
        %1997 = vrot.lane.b32.xlu0 %v1984, 92
        %v1998 = vpop.permute.xlu0 %1997
        %1999 = vrot.lane.b32.xlu0 %v1985, 92
        %v2000 = vpop.permute.xlu0 %1999
        %2001 = vrot.lane.b32.xlu0 %v1986, 92
        %v2002 = vpop.permute.xlu0 %2001
        %vm2011 = vcmask 786144
        %2012 = vst.msk [vmem:[#allocation2] sm:$0xff] %vm2011, %v1988
        %2013 = vst.msk [vmem:[#allocation2 + $0x8] sm:$0xff] %vm2011, %v1990
        %2014 = vst.msk [vmem:[#allocation2 + $0x10] sm:$0xff] %vm2011, %v1992
        %2015 = vst.msk [vmem:[#allocation2 + $0x18] sm:$0xff] %vm2011, %v1994
        %2016 = vst.msk [vmem:[#allocation2 + $0x20] sm:$0xff] %vm2011, %v1996
        %2017 = vst.msk [vmem:[#allocation2 + $0x28] sm:$0xff] %vm2011, %v1998
        %2018 = vst.msk [vmem:[#allocation2 + $0x30] sm:$0xff] %vm2011, %v2000
        %2019 = vst.msk [vmem:[#allocation2 + $0x38] sm:$0xff] %vm2011, %v2002
        %v2024 = vunpack.c.l.b16 %v265
        %v2025 = vunpack.c.l.b16 %v266
        %v2026 = vunpack.c.l.b16 %v268
        %v2027 = vunpack.c.l.b16 %v269
        %v2028 = vunpack.c.l.b16 %v271
        %v2029 = vunpack.c.l.b16 %v272
        %v2030 = vunpack.c.l.b16 %v274
        %v2031 = vunpack.c.l.b16 %v275
        %v2032 = vpack.c.b16 %v2025, %v2024
        %v2033 = vpack.c.b16 %v2027, %v2026
        %v2034 = vpack.c.b16 %v2029, %v2028
        %v2035 = vpack.c.b16 %v2031, %v2030
        %2036 = vrot.lane.b32.xlu0 %v1909, 96
        %v2037 = vpop.permute.xlu0 %2036
        %2038 = vrot.lane.b32.xlu0 %v1910, 96
        %v2039 = vpop.permute.xlu0 %2038
        %2040 = vrot.lane.b32.xlu0 %v1911, 96
        %v2041 = vpop.permute.xlu0 %2040
        %2042 = vrot.lane.b32.xlu0 %v1912, 96
        %v2043 = vpop.permute.xlu0 %2042
        %2044 = vrot.lane.b32.xlu0 %v2032, 96
        %v2045 = vpop.permute.xlu0 %2044
        %2046 = vrot.lane.b32.xlu0 %v2033, 96
        %v2047 = vpop.permute.xlu0 %2046
        %2048 = vrot.lane.b32.xlu0 %v2034, 96
        %v2049 = vpop.permute.xlu0 %2048
        %2050 = vrot.lane.b32.xlu0 %v2035, 96
        %v2051 = vpop.permute.xlu0 %2050
        %vm2060 = vcmask 818944
        %2061 = vst.msk [vmem:[#allocation2] sm:$0xff] %vm2060, %v2037
        %2062 = vst.msk [vmem:[#allocation2 + $0x8] sm:$0xff] %vm2060, %v2039
        %2063 = vst.msk [vmem:[#allocation2 + $0x10] sm:$0xff] %vm2060, %v2041
        %2064 = vst.msk [vmem:[#allocation2 + $0x18] sm:$0xff] %vm2060, %v2043
        %2065 = vst.msk [vmem:[#allocation2 + $0x20] sm:$0xff] %vm2060, %v2045
        %2066 = vst.msk [vmem:[#allocation2 + $0x28] sm:$0xff] %vm2060, %v2047
        %2067 = vst.msk [vmem:[#allocation2 + $0x30] sm:$0xff] %vm2060, %v2049
        %2068 = vst.msk [vmem:[#allocation2 + $0x38] sm:$0xff] %vm2060, %v2051
        %v2071 = vrot.slane %v271, 6
        %v2072 = vrot.slane %v2071, 4
        %v2073 = vrot.slane %v272, 6
        %v2074 = vsel %vm571, %v2072, %v2073
        %v2075 = vrot.slane %v2073, 4
        %v2076 = vrot.slane %v273, 6
        %v2077 = vsel %vm571, %v2075, %v2076
        %v2078 = vrot.slane %v274, 6
        %v2079 = vrot.slane %v2078, 4
        %v2080 = vrot.slane %v275, 6
        %v2081 = vsel %vm571, %v2079, %v2080
        %v2082 = vrot.slane %v2080, 4
        %v2083 = vrot.slane %v276, 6
        %v2084 = vsel %vm571, %v2082, %v2083
        %v2085 = vunpack.c.l.b16 %v2074
        %v2086 = vunpack.c.l.b16 %v2077
        %v2087 = vunpack.c.l.b16 %v2081
        %v2088 = vunpack.c.l.b16 %v2084
        %v2089 = vpack.c.b16 %v2086, %v2085
        %v2090 = vpack.c.b16 %v2088, %v2087
        %2091 = vrot.lane.b32.xlu0 %v649, 100
        %v2092 = vpop.permute.xlu0 %2091
        %2093 = vrot.lane.b32.xlu0 %v650, 100
        %v2094 = vpop.permute.xlu0 %2093
        %2095 = vrot.lane.b32.xlu0 %v651, 100
        %v2096 = vpop.permute.xlu0 %2095
        %2097 = vrot.lane.b32.xlu0 %v925, 100
        %v2098 = vpop.permute.xlu0 %2097
        %2099 = vrot.lane.b32.xlu0 %v1084, 100
        %v2100 = vpop.permute.xlu0 %2099
        %2101 = vrot.lane.b32.xlu0 %v1649, 100
        %v2102 = vpop.permute.xlu0 %2101
        %2103 = vrot.lane.b32.xlu0 %v2089, 100
        %v2104 = vpop.permute.xlu0 %2103
        %2105 = vrot.lane.b32.xlu0 %v2090, 100
        %v2106 = vpop.permute.xlu0 %2105
        %vm2115 = vcmask 851744
        %2116 = vst.msk [vmem:[#allocation2] sm:$0xff] %vm2115, %v2092
        %2117 = vst.msk [vmem:[#allocation2 + $0x8] sm:$0xff] %vm2115, %v2094
        %2118 = vst.msk [vmem:[#allocation2 + $0x10] sm:$0xff] %vm2115, %v2096
        %2119 = vst.msk [vmem:[#allocation2 + $0x18] sm:$0xff] %vm2115, %v2098
        %2120 = vst.msk [vmem:[#allocation2 + $0x20] sm:$0xff] %vm2115, %v2100
        %2121 = vst.msk [vmem:[#allocation2 + $0x28] sm:$0xff] %vm2115, %v2102
        %2122 = vst.msk [vmem:[#allocation2 + $0x30] sm:$0xff] %vm2115, %v2104
        %2123 = vst.msk [vmem:[#allocation2 + $0x38] sm:$0xff] %vm2115, %v2106
        %v2124 = vunpack.c.l.b16 %v267
        %v2125 = vunpack.c.l.b16 %v270
        %v2126 = vunpack.c.l.b16 %v273
        %v2127 = vunpack.c.l.b16 %v276
        %v2128 = vpack.c.b16 %v2124, %v2025
        %v2129 = vpack.c.b16 %v2125, %v2027
        %v2130 = vpack.c.b16 %v2126, %v2029
        %v2131 = vpack.c.b16 %v2127, %v2031
        %2132 = vrot.lane.b32.xlu0 %v1983, 104
        %v2133 = vpop.permute.xlu0 %2132
        %2134 = vrot.lane.b32.xlu0 %v1984, 104
        %v2135 = vpop.permute.xlu0 %2134
        %2136 = vrot.lane.b32.xlu0 %v1985, 104
        %v2137 = vpop.permute.xlu0 %2136
        %2138 = vrot.lane.b32.xlu0 %v1986, 104
        %v2139 = vpop.permute.xlu0 %2138
        %2140 = vrot.lane.b32.xlu0 %v2128, 104
        %v2141 = vpop.permute.xlu0 %2140
        %2142 = vrot.lane.b32.xlu0 %v2129, 104
        %v2143 = vpop.permute.xlu0 %2142
        %2144 = vrot.lane.b32.xlu0 %v2130, 104
        %v2145 = vpop.permute.xlu0 %2144
        %2146 = vrot.lane.b32.xlu0 %v2131, 104
        %v2147 = vpop.permute.xlu0 %2146
        %vm2156 = vcmask 884544
        %2157 = vst.msk [vmem:[#allocation2] sm:$0xff] %vm2156, %v2133
        %2158 = vst.msk [vmem:[#allocation2 + $0x8] sm:$0xff] %vm2156, %v2135
        %2159 = vst.msk [vmem:[#allocation2 + $0x10] sm:$0xff] %vm2156, %v2137
        %2160 = vst.msk [vmem:[#allocation2 + $0x18] sm:$0xff] %vm2156, %v2139
        %2161 = vst.msk [vmem:[#allocation2 + $0x20] sm:$0xff] %vm2156, %v2141
        %2162 = vst.msk [vmem:[#allocation2 + $0x28] sm:$0xff] %vm2156, %v2143
        %2163 = vst.msk [vmem:[#allocation2 + $0x30] sm:$0xff] %vm2156, %v2145
        %2164 = vst.msk [vmem:[#allocation2 + $0x38] sm:$0xff] %vm2156, %v2147
        %v2165 = vld [vmem:[#allocation2] sm:$0xff]
        %v2166 = vld [vmem:[#allocation2 + $0x8] sm:$0xff]
        %v2167 = vld [vmem:[#allocation2 + $0x10] sm:$0xff]
        %v2168 = vld [vmem:[#allocation2 + $0x18] sm:$0xff]
        %v2169 = vld [vmem:[#allocation2 + $0x20] sm:$0xff]
        %v2170 = vld [vmem:[#allocation2 + $0x28] sm:$0xff]
        %v2171 = vld [vmem:[#allocation2 + $0x30] sm:$0xff]
        %v2172 = vld [vmem:[#allocation2 + $0x38] sm:$0xff]
        %v2173 = vld [vmem:[%s219] sm:$0xf]
        %v2174 = vld [vmem:[%s219 + $0x4] sm:$0xf]
        %v2175 = vld [vmem:[%s219 + $0x8] sm:$0xf]
        %v2176 = vld [vmem:[%s219 + $0xc] sm:$0xf]
        %v2177 = vld [vmem:[%s219 + $0x10] sm:$0xf]
        %v2178 = vld [vmem:[%s219 + $0x14] sm:$0xf]
        %v2179 = vld [vmem:[%s219 + $0x18] sm:$0xf]
        %v2180 = vld [vmem:[%s219 + $0x1c] sm:$0xf]
        %v2181 = vld [vmem:[%s219 + $0x20] sm:$0xf]
        %v2182 = vld [vmem:[%s219 + $0x24] sm:$0xf]
        %v2183 = vld [vmem:[%s219 + $0x28] sm:$0xf]
        %v2184 = vld [vmem:[%s219 + $0x2c] sm:$0xf]
        %v2185 = vld [vmem:[%s219 + $0x30] sm:$0xf]
        %v2186 = vld [vmem:[%s219 + $0x34] sm:$0x3]
        %v2187 = vld [vmem:[%s222] sm:$0x1]
        %v2189 = vlaneseq
        %v2190 = vshrl.u32 %v2189, 7
        %v2191 = vsub.s32 0, %v2190
        %v2192 = vrot.slane %v2187, %v2191
        %v2208 = vunpack.c.l.b16 %v2173
        %v2209 = vunpack.c.l.b16 %v2174
        %v2210 = vunpack.c.l.b16 %v2175
        %v2211 = vunpack.c.l.b16 %v2176
        %v2212 = vunpack.c.l.b16 %v2177
        %v2213 = vunpack.c.l.b16 %v2178
        %v2214 = vunpack.c.l.b16 %v2179
        %v2215 = vunpack.c.l.b16 %v2180
        %v2216 = vunpack.c.l.b16 %v2181
        %v2217 = vunpack.c.l.b16 %v2182
        %v2218 = vunpack.c.l.b16 %v2183
        %v2219 = vunpack.c.l.b16 %v2184
        %v2220 = vunpack.c.l.b16 %v2185
        %v2221 = vunpack.c.l.b16 %v2186
        %v2222 = vpack.c.b16 %v2209, %v2208
        %v2223 = vpack.c.b16 %v2211, %v2210
        %v2224 = vpack.c.b16 %v2213, %v2212
        %v2225 = vpack.c.b16 %v2215, %v2214
        %v2226 = vpack.c.b16 %v2217, %v2216
        %v2227 = vpack.c.b16 %v2219, %v2218
        %v2228 = vpack.c.b16 %v2221, %v2220
        %vm2235 = vcmask 883712
        %v2237 = vsel %vm2235, %v2165, 0
        %v2240 = vsel %vm2235, %v2166, 0
        %v2243 = vsel %vm2235, %v2167, 0
        %v2246 = vsel %vm2235, %v2168, 0
        %v2249 = vsel %vm2235, %v2169, 0
        %v2252 = vsel %vm2235, %v2170, 0
        %v2255 = vsel %vm2235, %v2171, 0
        %v2258 = vsel %vm2235, %v2172, 0
        %vm2260 = vcmask 1045504
        %v2262 = vsel %vm2260, %v2228, 0
        %2264 = vmatprep.subr.bf16.mxu0 0
        %2265 = vmatpush1.bf16.msra.mxu0 %v2222
        %2266 = vmatprep.subr.bf16.mxu0 0
        %2267 = vmatpush1.bf16.msra.mxu0 %v2223
        %2268 = vmatprep.subr.bf16.mxu0 0
        %2269 = vmatpush1.bf16.msra.mxu0 %v2224
        %2270 = vmatprep.subr.bf16.mxu0 0
        %2271 = vmatpush1.bf16.msra.mxu0 %v2225
        %2272 = vmatprep.subr.bf16.mxu0 0
        %2273 = vmatpush1.bf16.msra.mxu0 %v2226
        %2274 = vmatprep.subr.bf16.mxu0 0
        %2275 = vmatpush1.bf16.msra.mxu0 %v2227
        %2276 = vmatprep.subr.bf16.mxu0 0
        %2277 = vmatpush1.bf16.msra.mxu0 %v2262
        %2278 = vmatprep.subr.bf16.mxu0 0
        %2279 = vmatpush1.bf16.msra.mxu0 0
        %2280 = vmatprep.subr.bf16.mxu0 0
        %2281 = vmatpush1.bf16.msra.mxu0 0
        %2282 = vmatprep.subr.bf16.mxu0 0
        %2283 = vmatpush1.bf16.msra.mxu0 0
        %2284 = vmatprep.subr.bf16.mxu0 0
        %2285 = vmatpush1.bf16.msra.mxu0 0
        %2286 = vmatprep.subr.bf16.mxu0 0
        %2287 = vmatpush1.bf16.msra.mxu0 0
        %2288 = vmatprep.subr.bf16.mxu0 0
        %2289 = vmatpush1.bf16.msra.mxu0 0
        %2290 = vmatprep.subr.bf16.mxu0 0
        %2291 = vmatpush1.bf16.msra.mxu0 0
        %2292 = vmatprep.subr.bf16.mxu0 0
        %2293 = vmatpush1.bf16.msra.mxu0 0
        %2294 = vmatprep.subr.bf16.mxu0 0
        %2295 = vmatpush1.bf16.msra.mxu0 0
        %2296 = vmatprep.mubr.bf16.mxu0 0
        %2297 = vmatmul.mubr.bf16.gmra.mrb[0].mxu0 %v2237
        %v2298 = vpop.f32.mrb[0].mxu0
        %v2299 = vadd.f32 %v2192, %v2298
        %v2300 = vpop.f32.mrb[0].mxu0
        %v2301 = vpop.f32.mrb[0].mxu0
        %v2302 = vadd.f32 %v2192, %v2301
        %v2303 = vpop.f32.mrb[0].mxu0
        %2304 = vmatprep.mubr.bf16.mxu0 0
        %2305 = vmatmul.mubr.bf16.gmra.mrb[0].mxu0 %v2240
        %v2306 = vpop.f32.mrb[0].mxu0
        %v2307 = vadd.f32 %v2192, %v2306
        %v2308 = vpop.f32.mrb[0].mxu0
        %v2309 = vpop.f32.mrb[0].mxu0
        %v2310 = vadd.f32 %v2192, %v2309
        %v2311 = vpop.f32.mrb[0].mxu0
        %2312 = vmatprep.mubr.bf16.mxu0 0
        %2313 = vmatmul.mubr.bf16.gmra.mrb[0].mxu0 %v2243
        %v2314 = vpop.f32.mrb[0].mxu0
        %v2315 = vadd.f32 %v2192, %v2314
        %v2316 = vpop.f32.mrb[0].mxu0
        %v2317 = vpop.f32.mrb[0].mxu0
        %v2318 = vadd.f32 %v2192, %v2317
        %v2319 = vpop.f32.mrb[0].mxu0
        %2320 = vmatprep.mubr.bf16.mxu0 0
        %2321 = vmatmul.mubr.bf16.gmra.mrb[0].mxu0 %v2246
        %v2322 = vpop.f32.mrb[0].mxu0
        %v2323 = vadd.f32 %v2192, %v2322
        %v2324 = vpop.f32.mrb[0].mxu0
        %v2325 = vpop.f32.mrb[0].mxu0
        %v2326 = vadd.f32 %v2192, %v2325
        %v2327 = vpop.f32.mrb[0].mxu0
        %2328 = vmatprep.mubr.bf16.mxu0 0
        %2329 = vmatmul.mubr.bf16.gmra.mrb[0].mxu0 %v2249
        %v2330 = vpop.f32.mrb[0].mxu0
        %v2331 = vadd.f32 %v2192, %v2330
        %v2332 = vpop.f32.mrb[0].mxu0
        %v2333 = vpop.f32.mrb[0].mxu0
        %v2334 = vadd.f32 %v2192, %v2333
        %v2335 = vpop.f32.mrb[0].mxu0
        %2336 = vmatprep.mubr.bf16.mxu0 0
        %2337 = vmatmul.mubr.bf16.gmra.mrb[0].mxu0 %v2252
        %v2338 = vpop.f32.mrb[0].mxu0
        %v2339 = vadd.f32 %v2192, %v2338
        %v2340 = vpop.f32.mrb[0].mxu0
        %v2341 = vpop.f32.mrb[0].mxu0
        %v2342 = vadd.f32 %v2192, %v2341
        %v2343 = vpop.f32.mrb[0].mxu0
        %2344 = vmatprep.mubr.bf16.mxu0 0
        %2345 = vmatmul.mubr.bf16.gmra.mrb[0].mxu0 %v2255
        %v2346 = vpop.f32.mrb[0].mxu0
        %v2347 = vadd.f32 %v2192, %v2346
        %v2348 = vpop.f32.mrb[0].mxu0
        %v2349 = vpop.f32.mrb[0].mxu0
        %v2350 = vadd.f32 %v2192, %v2349
        %v2351 = vpop.f32.mrb[0].mxu0
        %2352 = vmatprep.mubr.bf16.mxu0 0
        %2353 = vmatmul.mubr.bf16.gmra.mrb[0].mxu0 %v2258
        %v2354 = vpop.f32.mrb[0].mxu0
        %v2355 = vadd.f32 %v2192, %v2354
        %v2356 = vpop.f32.mrb[0].mxu0
        %v2357 = vpop.f32.mrb[0].mxu0
        %v2358 = vadd.f32 %v2192, %v2357
        %v2359 = vpop.f32.mrb[0].mxu0
        %2360 = vdwg.mxu0
        %2361 = vst [vmem:[%s210] sm:$0xff] %v2299
        %2362 = vst [vmem:[%s210 + $0x8] sm:$0xff] %v2302
        %2363 = vst [vmem:[%s210 + $0x10] sm:$0xff] %v2307
        %2364 = vst [vmem:[%s210 + $0x18] sm:$0xff] %v2310
        %2365 = vst [vmem:[%s210 + $0x20] sm:$0xff] %v2315
        %2366 = vst [vmem:[%s210 + $0x28] sm:$0xff] %v2318
        %2367 = vst [vmem:[%s210 + $0x30] sm:$0xff] %v2323
        %2368 = vst [vmem:[%s210 + $0x38] sm:$0xff] %v2326
        %2369 = vst [vmem:[%s210 + $0x40] sm:$0xff] %v2331
        %2370 = vst [vmem:[%s210 + $0x48] sm:$0xff] %v2334
        %2371 = vst [vmem:[%s210 + $0x50] sm:$0xff] %v2339
        %2372 = vst [vmem:[%s210 + $0x58] sm:$0xff] %v2342
        %2373 = vst [vmem:[%s210 + $0x60] sm:$0xff] %v2347
        %2374 = vst [vmem:[%s210 + $0x68] sm:$0xff] %v2350
        %2375 = vst [vmem:[%s210 + $0x70] sm:$0xff] %v2355
        %2376 = vst [vmem:[%s210 + $0x78] sm:$0xff] %v2358
        %s2377 = sand.u32 %s126, 1
        %s2378 = scalar_lea.sflag [#allocation4], %s2377
        %s2379 = sand.u32 %s126, 1
        %s2380 = smul.addr %s2379, 128
        %s2381 = scalar_lea.vmem [#allocation3], %s2380
        // Predicated region
        $region33: #{tpu_custom_call.1} parent=31 // pred_check
          %p2382 = pneg %p136
        $region34: #{tpu_custom_call.1} parent=31 // pred_check_branch
          %2384 = sbr.rel (%p2382) target = $region36
        $region35: #{tpu_custom_call.1} parent=31 // pred_region
          %s2385 = smul.u32 8, %s23
          %s2387 = ssub.s32 2048, 2048
          %2388 = vsyncadd %s2378, %s2387
          %s2389 = smul.addr %s2385, 2
          %s2390 = sadd.s32 %s24, %s2389
          %s2391 = smul.addr %s22, 32
          %s2392 = sadd.s32 %s2390, %s2391
          %s2393 = smul.addr %s2392, 128
          %s2394 = scalar_lea.hbm %s3, %s2393
          %s2395 = sshll.u32 %s2381, 4
          %s2396 = int_to_ptr.vmem [resolvable:$true] %s2395
          %2401 = dma.vmem_to_hbm [thread:$0]  %s2396, 2048, %s2394, %s2378, 128, 128, 8
        $region36: #{tpu_custom_call.1} parent=31 // pred_fallthru
          _
      $region32: #{tpu_custom_call.1} parent=5 // pred_fallthru
        _
      %p2402 = scmp.le.s32.totalorder 2, %s12
      // Predicated region
      $region37: #{tpu_custom_call.1} parent=5 // pred_check
        %p2403 = pneg %p2402
      $region38: #{tpu_custom_call.1} parent=5 // pred_check_branch
        %2405 = sbr.rel (%p2403) target = $region40
      $region39: #{tpu_custom_call.1} parent=5 // pred_region
        %s2406 = ssub.s32 %s12, 2
        // Predicated region
        $region41: #{tpu_custom_call.1} parent=39 // pred_check
          %p2407 = pneg %p142
        $region42: #{tpu_custom_call.1} parent=39 // pred_check_branch
          %2409 = sbr.rel (%p2407) target = $region44
        $region43: #{tpu_custom_call.1} parent=39 // pred_region
          %s2410 = sand.u32 %s127, 1
          %s2411 = scalar_lea.sflag [#allocation4], %s2410
          %s2412 = sand.u32 %s127, 1
          %s2413 = smul.addr %s2412, 128
          %s2414 = scalar_lea.vmem [#allocation3], %s2413
          %2415 = dma.done %s2411, 2048
        $region44: #{tpu_custom_call.1} parent=39 // pred_fallthru
          _
      $region40: #{tpu_custom_call.1} parent=5 // pred_fallthru
        _
    $region6: #{tpu_custom_call.1} parent=1 // loop_footer
      %s16 = sadd.s32 1, %s12
    $region7: #{tpu_custom_call.1} parent=1 // loop_footer_branch
      %11 = sbr.rel target = $region3
    $region8: #{tpu_custom_call.1} parent=1 // loop_exit
      _
    %2416 = vsyncpa [#allocation4], 1
    %s2417 = scalar_lea.sflag [#allocation4], 1
    %2418 = vsyncpa %s2417, 1

</llo_original>
